<compile_context>
chip_gen: v6e
topology: v6e:2x2x1
jax: 0.10.0
libtpu: 0.0.40
codegen_flags: <defaults>
</compile_context>

<pallas_src>
import math

import jax
import jax.numpy as jnp
from jax.experimental import pallas as pl
from jax.experimental.pallas import tpu as pltpu

_LOG2 = math.log(2.0)
_LANE = 128
_SUBLANE = 8


def _ssp(v):
    # shifted softplus: softplus(x) - ln(2)
    return jax.nn.softplus(v) - _LOG2


def _round_up(x, m):
    return ((x + m - 1) // m) * m


def schnet_interaction_kernel(
    x_ref, f_ij_ref, idx_i_ref, idx_j_ref, rcut_ref,
    w_in2f_ref,
    w_f1_ref, b_f1_ref, w_f2_ref, b_f2_ref,
    w_o1_ref, b_o1_ref, w_o2_ref, b_o2_ref,
    out_ref,
    xf_ref, acc_ref,
):
    k = pl.program_id(0)
    n_atoms_p = x_ref.shape[0]
    tp = f_ij_ref.shape[0]

    # ---- hoisted work: in2f matmul + accumulator init (only at first tile) ----
    @pl.when(k == 0)
    def _init():
        xf_ref[...] = jnp.dot(x_ref[...], w_in2f_ref[...],
                              preferred_element_type=jnp.float32)
        acc_ref[...] = jnp.zeros_like(acc_ref)

    # ---- filter_network on this pair tile: Dense(+ssp) then Dense ----
    h = _ssp(jnp.dot(f_ij_ref[...], w_f1_ref[...],
                     preferred_element_type=jnp.float32) + b_f1_ref[...])
    w_ij = jnp.dot(h, w_f2_ref[...],
                   preferred_element_type=jnp.float32) + b_f2_ref[...]
    w_ij = w_ij * rcut_ref[...]                         # [TP, F]  (padded pairs: rcut=0 -> 0)

    # ---- per-tile one-hots built from a single [TP, A] iota (bf16 for MXU) ----
    atom_iota = jax.lax.broadcasted_iota(jnp.int32, (tp, n_atoms_p), 1)
    gather_oh = (idx_j_ref[...] == atom_iota).astype(jnp.bfloat16)    # [TP, A]
    scatter_oh = (idx_i_ref[...] == atom_iota).astype(jnp.bfloat16)   # [TP, A]

    # gather x_j = xf[idx_j] as a bf16 one-hot matmul (f32 accumulation)
    # TODO(synk): for large n_atoms replace with an index-driven row fetch of xf
    # (scalar-prefetched idx_j) instead of O(TP*A*F) synthetic MXU work.
    x_j = jnp.dot(gather_oh, xf_ref[...].astype(jnp.bfloat16),
                  preferred_element_type=jnp.float32)                 # [TP, F]

    # continuous-filter convolution
    x_ij = x_j * w_ij                                                 # [TP, F] f32

    # scatter_add over idx_i: contract the pair axis (== scatter_oh.T @ x_ij)
    acc_ref[...] += jax.lax.dot_general(
        scatter_oh, x_ij.astype(jnp.bfloat16),
        dimension_numbers=(((0,), (0,)), ((), ())),
        preferred_element_type=jnp.float32)                           # [A, F]

    # ---- finalize: f2out only once, at the last pair tile ----
    @pl.when(k == pl.num_programs(0) - 1)
    def _finalize():
        agg = acc_ref[...]
        y = _ssp(jnp.dot(agg, w_o1_ref[...],
                         preferred_element_type=jnp.float32) + b_o1_ref[...])
        y = jnp.dot(y, w_o2_ref[...],
                    preferred_element_type=jnp.float32) + b_o2_ref[...]
        out_ref[...] = y.astype(out_ref.dtype)


def schnet_interaction(x, f_ij, idx_i, idx_j, rcut_ij, params, *, pair_tile=128):
    n_atoms, n_basis = x.shape
    n_pairs, n_rbf = f_ij.shape
    n_filters = params["w_in2f"].shape[1]

    # padded sizes: lane-dense feature dims, sublane-aligned atoms, tiled pairs
    A = _round_up(n_atoms, _SUBLANE)
    B = _round_up(n_basis, _LANE)
    F = _round_up(n_filters, _LANE)
    R = _round_up(n_rbf, _LANE)
    TP = pair_tile
    P = _round_up(max(n_pairs, 1), TP)
    n_tiles = P // TP

    f32 = jnp.float32

    def pad2(a, r, c):
        out = jnp.zeros((r, c), f32)
        return out.at[: a.shape[0], : a.shape[1]].set(a.astype(f32))

    xp = pad2(x, A, B)
    fp = pad2(f_ij, P, R)
    # padded pairs: idx = 0 and rcut = 0  ->  x_ij row is exactly zero (no-op)
    ii = jnp.zeros((P, 1), jnp.int32).at[:n_pairs, 0].set(idx_i.astype(jnp.int32))
    ij = jnp.zeros((P, 1), jnp.int32).at[:n_pairs, 0].set(idx_j.astype(jnp.int32))
    rc = jnp.zeros((P, 1), f32).at[:n_pairs, 0].set(rcut_ij.astype(f32))

    w_in2f = pad2(params["w_in2f"], B, F)
    w_f1 = pad2(params["w_f1"], R, F)
    b_f1 = pad2(params["b_f1"], 1, F)
    w_f2 = pad2(params["w_f2"], F, F)
    b_f2 = pad2(params["b_f2"], 1, F)
    w_o1 = pad2(params["w_o1"], F, B)
    b_o1 = pad2(params["b_o1"], 1, B)
    w_o2 = pad2(params["w_o2"], B, B)
    b_o2 = pad2(params["b_o2"], 1, B)

    grid_spec = pltpu.PrefetchScalarGridSpec(
        num_scalar_prefetch=0,
        grid=(n_tiles,),
        in_specs=[
            pl.BlockSpec((A, B), lambda k: (0, 0)),      # x (resident)
            pl.BlockSpec((TP, R), lambda k: (k, 0)),     # f_ij tile
            pl.BlockSpec((TP, 1), lambda k: (k, 0)),     # idx_i tile
            pl.BlockSpec((TP, 1), lambda k: (k, 0)),     # idx_j tile
            pl.BlockSpec((TP, 1), lambda k: (k, 0)),     # rcut tile
            pl.BlockSpec((B, F), lambda k: (0, 0)),      # w_in2f (resident)
            pl.BlockSpec((R, F), lambda k: (0, 0)),      # w_f1
            pl.BlockSpec((1, F), lambda k: (0, 0)),      # b_f1
            pl.BlockSpec((F, F), lambda k: (0, 0)),      # w_f2
            pl.BlockSpec((1, F), lambda k: (0, 0)),      # b_f2
            pl.BlockSpec((F, B), lambda k: (0, 0)),      # w_o1
            pl.BlockSpec((1, B), lambda k: (0, 0)),      # b_o1
            pl.BlockSpec((B, B), lambda k: (0, 0)),      # w_o2
            pl.BlockSpec((1, B), lambda k: (0, 0)),      # b_o2
        ],
        out_specs=pl.BlockSpec((A, B), lambda k: (0, 0)),  # resident accumulator-style output
        scratch_shapes=[
            pltpu.VMEM((A, F), jnp.float32),   # xf = x @ w_in2f (hoisted)
            pltpu.VMEM((A, F), jnp.float32),   # scatter-add accumulator
        ],
    )

    out_pad = pl.pallas_call(
        schnet_interaction_kernel,
        out_shape=jax.ShapeDtypeStruct((A, B), jnp.float32),
        grid_spec=grid_spec,
        compiler_params=pltpu.CompilerParams(
            dimension_semantics=("arbitrary",)),   # pair axis is a reduction
    )(xp, fp, ii, ij, rc,
      w_in2f, w_f1, b_f1, w_f2, b_f2, w_o1, b_o1, w_o2, b_o2)

    return out_pad[:n_atoms, :n_basis]


def schnet_interaction_ref(x, f_ij, idx_i, idx_j, rcut_ij, p):
    """Pure-JAX reference mirroring the PyTorch forward."""
    xf = x @ p["w_in2f"]
    h = _ssp(f_ij @ p["w_f1"] + p["b_f1"])
    w_ij = (h @ p["w_f2"] + p["b_f2"]) * rcut_ij[:, None]
    x_j = xf[idx_j]
    x_ij = x_j * w_ij
    agg = jax.ops.segment_sum(x_ij, idx_i, num_segments=x.shape[0])
    y = _ssp(agg @ p["w_o1"] + p["b_o1"])
    return y @ p["w_o2"] + p["b_o2"]


def make_params(key, n_atom_basis, n_rbf, n_filters):
    ks = jax.random.split(key, 8)
    s = 0.1
    return {
        # in2f: Dense(n_atom_basis -> n_filters, bias=False)
        "w_in2f": s * jax.random.normal(ks[0], (n_atom_basis, n_filters), jnp.float32),
        # filter_network: Dense(n_rbf -> n_filters, ssp), Dense(n_filters -> n_filters)
        "w_f1": s * jax.random.normal(ks[1], (n_rbf, n_filters), jnp.float32),
        "b_f1": s * jax.random.normal(ks[2], (1, n_filters), jnp.float32),
        "w_f2": s * jax.random.normal(ks[3], (n_filters, n_filters), jnp.float32),
        "b_f2": s * jax.random.normal(ks[4], (1, n_filters), jnp.float32),
        # f2out: Dense(n_filters -> n_atom_basis, ssp), Dense(n_atom_basis -> n_atom_basis)
        "w_o1": s * jax.random.normal(ks[5], (n_filters, n_atom_basis), jnp.float32),
        "b_o1": s * jax.random.normal(ks[6], (1, n_atom_basis), jnp.float32),
        "w_o2": s * jax.random.normal(ks[7], (n_atom_basis, n_atom_basis), jnp.float32),
        "b_o2": jnp.zeros((1, n_atom_basis), jnp.float32),
    }


if __name__ == "__main__":
    # Small but non-trivial: 200 pairs with pair_tile=128 -> 2 grid steps,
    # exercising the accumulator init/accumulate/finalize path and padding.
    n_atoms, n_atom_basis, n_rbf, n_filters, n_pairs = 16, 32, 20, 48, 200

    key = jax.random.PRNGKey(0)
    k_x, k_f, k_i, k_j, k_r, k_p = jax.random.split(key, 6)

    x = jax.random.normal(k_x, (n_atoms, n_atom_basis), jnp.float32)
    f_ij = jax.random.normal(k_f, (n_pairs, n_rbf), jnp.float32)
    idx_i = jax.random.randint(k_i, (n_pairs,), 0, n_atoms, dtype=jnp.int32)
    idx_j = jax.random.randint(k_j, (n_pairs,), 0, n_atoms, dtype=jnp.int32)
    rcut_ij = jax.random.uniform(k_r, (n_pairs,), jnp.float32)

    params = make_params(k_p, n_atom_basis, n_rbf, n_filters)

    out = schnet_interaction(x, f_ij, idx_i, idx_j, rcut_ij, params, pair_tile=128)
    out = jax.block_until_ready(out)

    ref = schnet_interaction_ref(x, f_ij, idx_i, idx_j, rcut_ij, params)
    assert out.shape == (n_atoms, n_atom_basis)
    # bf16 one-hot matmul operands -> tolerance slightly looser than pure-f32
    assert jnp.allclose(out, ref, atol=5e-3, rtol=5e-3), float(
        jnp.max(jnp.abs(out - ref)))

    print("KERNEL_OK")
</pallas_src>

<mosaic_0001>
module attributes {stable_mosaic.version = 11 : i64} {
  func.func @schnet_interaction_kernel(%arg0: i32, %arg1: memref<16x128xf32, #tpu.memory_space<vmem>>, %arg2: memref<128x128xf32, #tpu.memory_space<vmem>>, %arg3: memref<128x1xi32, #tpu.memory_space<vmem>>, %arg4: memref<128x1xi32, #tpu.memory_space<vmem>>, %arg5: memref<128x1xf32, #tpu.memory_space<vmem>>, %arg6: memref<128x128xf32, #tpu.memory_space<vmem>>, %arg7: memref<128x128xf32, #tpu.memory_space<vmem>>, %arg8: memref<1x128xf32, #tpu.memory_space<vmem>>, %arg9: memref<128x128xf32, #tpu.memory_space<vmem>>, %arg10: memref<1x128xf32, #tpu.memory_space<vmem>>, %arg11: memref<128x128xf32, #tpu.memory_space<vmem>>, %arg12: memref<1x128xf32, #tpu.memory_space<vmem>>, %arg13: memref<128x128xf32, #tpu.memory_space<vmem>>, %arg14: memref<1x128xf32, #tpu.memory_space<vmem>>, %arg15: memref<16x128xf32, #tpu.memory_space<vmem>>, %arg16: memref<16x128xf32, #tpu.memory_space<vmem>>, %arg17: memref<16x128xf32, #tpu.memory_space<vmem>>) attributes {dimension_semantics = [#tpu.dimension_semantics<arbitrary>], iteration_bounds = array<i64: 2>, scalar_prefetch = 0 : i64, scratch_operands = 2 : i64, tpu.core_type = #tpu.core_type<tc>, window_params = [{pipeline_mode = #tpu.pipeline_mode<synchronous>, transform_indices = @transform_0, window_bounds = array<i64: 16, 128>}, {transform_indices = @transform_1, window_bounds = array<i64: 128, 128>}, {transform_indices = @transform_2, window_bounds = array<i64: 128, 1>}, {transform_indices = @transform_3, window_bounds = array<i64: 128, 1>}, {transform_indices = @transform_4, window_bounds = array<i64: 128, 1>}, {pipeline_mode = #tpu.pipeline_mode<synchronous>, transform_indices = @transform_5, window_bounds = array<i64: 128, 128>}, {pipeline_mode = #tpu.pipeline_mode<synchronous>, transform_indices = @transform_6, window_bounds = array<i64: 128, 128>}, {pipeline_mode = #tpu.pipeline_mode<synchronous>, transform_indices = @transform_7, window_bounds = array<i64: 1, 128>}, {pipeline_mode = #tpu.pipeline_mode<synchronous>, transform_indices = @transform_8, window_bounds = array<i64: 128, 128>}, {pipeline_mode = #tpu.pipeline_mode<synchronous>, transform_indices = @transform_9, window_bounds = array<i64: 1, 128>}, {pipeline_mode = #tpu.pipeline_mode<synchronous>, transform_indices = @transform_10, window_bounds = array<i64: 128, 128>}, {pipeline_mode = #tpu.pipeline_mode<synchronous>, transform_indices = @transform_11, window_bounds = array<i64: 1, 128>}, {pipeline_mode = #tpu.pipeline_mode<synchronous>, transform_indices = @transform_12, window_bounds = array<i64: 128, 128>}, {pipeline_mode = #tpu.pipeline_mode<synchronous>, transform_indices = @transform_13, window_bounds = array<i64: 1, 128>}, {pipeline_mode = #tpu.pipeline_mode<synchronous>, transform_indices = @transform_14, window_bounds = array<i64: 16, 128>}]} {
    %c0_i32 = arith.constant 0 : i32
    %0 = arith.cmpi eq, %arg0, %c0_i32 : i32
    %1 = arith.extui %0 : i1 to i32
    %c0_i32_0 = arith.constant 0 : i32
    %2 = arith.cmpi ne, %1, %c0_i32_0 : i32
    scf.if %2 {
      %c0_29 = arith.constant 0 : index
      %c0_30 = arith.constant 0 : index
      %58 = vector.load %arg1[%c0_29, %c0_30] : memref<16x128xf32, #tpu.memory_space<vmem>>, vector<16x128xf32>
      %c0_31 = arith.constant 0 : index
      %c0_32 = arith.constant 0 : index
      %59 = vector.load %arg6[%c0_31, %c0_32] : memref<128x128xf32, #tpu.memory_space<vmem>>, vector<128x128xf32>
      %cst_33 = arith.constant dense<0.000000e+00> : vector<16x128xf32>
      %60 = tpu.matmul %58, %59, %cst_33 {dimension_numbers = #tpu.dot_dimension_numbers<[1], [0], [0], [1], [0, 0, 1, 1], [], []>} : vector<16x128xf32>, vector<128x128xf32>, vector<16x128xf32> -> vector<16x128xf32>
      %c0_34 = arith.constant 0 : index
      %c0_35 = arith.constant 0 : index
      %61 = vector.load %arg16[%c0_34, %c0_35] : memref<16x128xf32, #tpu.memory_space<vmem>>, vector<16x128xf32>
      tpu.vector_store %arg16[%c0_34, %c0_35], %60 {strides = array<i32>} : memref<16x128xf32, #tpu.memory_space<vmem>>, vector<16x128xf32>,
      %cst_36 = arith.constant 0.000000e+00 : f32
      %62 = vector.broadcast %cst_36 : f32 to vector<16x128xf32>
      %c0_37 = arith.constant 0 : index
      %c0_38 = arith.constant 0 : index
      %63 = vector.load %arg17[%c0_37, %c0_38] : memref<16x128xf32, #tpu.memory_space<vmem>>, vector<16x128xf32>
      tpu.vector_store %arg17[%c0_37, %c0_38], %62 {strides = array<i32>} : memref<16x128xf32, #tpu.memory_space<vmem>>, vector<16x128xf32>,
    } else {
    }
    %c0 = arith.constant 0 : index
    %c0_1 = arith.constant 0 : index
    %3 = vector.load %arg2[%c0, %c0_1] : memref<128x128xf32, #tpu.memory_space<vmem>>, vector<128x128xf32>
    %c0_2 = arith.constant 0 : index
    %c0_3 = arith.constant 0 : index
    %4 = vector.load %arg7[%c0_2, %c0_3] : memref<128x128xf32, #tpu.memory_space<vmem>>, vector<128x128xf32>
    %cst = arith.constant dense<0.000000e+00> : vector<128x128xf32>
    %5 = tpu.matmul %3, %4, %cst {dimension_numbers = #tpu.dot_dimension_numbers<[1], [0], [0], [1], [0, 0, 1, 1], [], []>} : vector<128x128xf32>, vector<128x128xf32>, vector<128x128xf32> -> vector<128x128xf32>
    %c0_4 = arith.constant 0 : index
    %c0_5 = arith.constant 0 : index
    %6 = vector.load %arg8[%c0_4, %c0_5] : memref<1x128xf32, #tpu.memory_space<vmem>>, vector<1x128xf32>
    %7 = vector.broadcast %6 : vector<1x128xf32> to vector<128x128xf32>
    %8 = arith.addf %5, %7 : vector<128x128xf32>
    %cst_6 = arith.constant 0.000000e+00 : f32
    %9 = vector.broadcast %cst_6 : f32 to vector<128x128xf32>
    %10 = arith.maximumf %8, %9 : vector<128x128xf32>
    %11 = vector.broadcast %cst_6 : f32 to vector<128x128xf32>
    %12 = arith.subf %8, %11 : vector<128x128xf32>
    %13 = arith.cmpf one, %12, %12 : vector<128x128xf32>
    %14 = vector.broadcast %cst_6 : f32 to vector<128x128xf32>
    %15 = arith.addf %8, %14 : vector<128x128xf32>
    %16 = math.absf %12 : vector<128x128xf32>
    %cst_7 = arith.constant 0.000000e+00 : f32
    %17 = vector.broadcast %cst_7 : f32 to vector<128x128xf32>
    %18 = arith.subf %17, %16 : vector<128x128xf32>
    %19 = math.exp %18 : vector<128x128xf32>
    %20 = math.log1p %19 : vector<128x128xf32>
    %21 = arith.addf %10, %20 : vector<128x128xf32>
    %22 = arith.select %13, %15, %21 : vector<128x128xi1>, vector<128x128xf32>
    %cst_8 = arith.constant 0.693147182 : f32
    %23 = vector.broadcast %cst_8 : f32 to vector<128x128xf32>
    %24 = arith.subf %22, %23 : vector<128x128xf32>
    %c0_9 = arith.constant 0 : index
    %c0_10 = arith.constant 0 : index
    %25 = vector.load %arg9[%c0_9, %c0_10] : memref<128x128xf32, #tpu.memory_space<vmem>>, vector<128x128xf32>
    %cst_11 = arith.constant dense<0.000000e+00> : vector<128x128xf32>
    %26 = tpu.matmul %24, %25, %cst_11 {dimension_numbers = #tpu.dot_dimension_numbers<[1], [0], [0], [1], [0, 0, 1, 1], [], []>} : vector<128x128xf32>, vector<128x128xf32>, vector<128x128xf32> -> vector<128x128xf32>
    %c0_12 = arith.constant 0 : index
    %c0_13 = arith.constant 0 : index
    %27 = vector.load %arg10[%c0_12, %c0_13] : memref<1x128xf32, #tpu.memory_space<vmem>>, vector<1x128xf32>
    %28 = vector.broadcast %27 : vector<1x128xf32> to vector<128x128xf32>
    %29 = arith.addf %26, %28 : vector<128x128xf32>
    %c0_14 = arith.constant 0 : index
    %c0_15 = arith.constant 0 : index
    %30 = vector.load %arg5[%c0_14, %c0_15] : memref<128x1xf32, #tpu.memory_space<vmem>>, vector<128x1xf32>
    %31 = vector.broadcast %30 : vector<128x1xf32> to vector<128x128xf32>
    %32 = arith.mulf %29, %31 : vector<128x128xf32>
    %33 = tpu.iota {dimensions = array<i32: 1>} : vector<128x16xi32>
    %c0_16 = arith.constant 0 : index
    %c0_17 = arith.constant 0 : index
    %34 = vector.load %arg4[%c0_16, %c0_17] : memref<128x1xi32, #tpu.memory_space<vmem>>, vector<128x1xi32>
    %35 = vector.broadcast %34 : vector<128x1xi32> to vector<128x16xi32>
    %36 = arith.cmpi eq, %35, %33 : vector<128x16xi32>
    %37 = arith.extui %36 : vector<128x16xi1> to vector<128x16xi32>
    %38 = arith.sitofp %37 : vector<128x16xi32> to vector<128x16xf32>
    %39 = arith.truncf %38 : vector<128x16xf32> to vector<128x16xbf16>
    %c0_18 = arith.constant 0 : index
    %c0_19 = arith.constant 0 : index
    %40 = vector.load %arg3[%c0_18, %c0_19] : memref<128x1xi32, #tpu.memory_space<vmem>>, vector<128x1xi32>
    %41 = vector.broadcast %40 : vector<128x1xi32> to vector<128x16xi32>
    %42 = arith.cmpi eq, %41, %33 : vector<128x16xi32>
    %43 = arith.extui %42 : vector<128x16xi1> to vector<128x16xi32>
    %44 = arith.sitofp %43 : vector<128x16xi32> to vector<128x16xf32>
    %45 = arith.truncf %44 : vector<128x16xf32> to vector<128x16xbf16>
    %c0_20 = arith.constant 0 : index
    %c0_21 = arith.constant 0 : index
    %46 = vector.load %arg16[%c0_20, %c0_21] : memref<16x128xf32, #tpu.memory_space<vmem>>, vector<16x128xf32>
    %47 = arith.truncf %46 : vector<16x128xf32> to vector<16x128xbf16>
    %cst_22 = arith.constant dense<0.000000e+00> : vector<128x128xf32>
    %48 = tpu.matmul %39, %47, %cst_22 {dimension_numbers = #tpu.dot_dimension_numbers<[1], [0], [0], [1], [0, 0, 1, 1], [], []>} : vector<128x16xbf16>, vector<16x128xbf16>, vector<128x128xf32> -> vector<128x128xf32>
    %49 = arith.mulf %48, %32 : vector<128x128xf32>
    %c0_23 = arith.constant 0 : index
    %c0_24 = arith.constant 0 : index
    %50 = vector.load %arg17[%c0_23, %c0_24] : memref<16x128xf32, #tpu.memory_space<vmem>>, vector<16x128xf32>
    %51 = arith.truncf %49 : vector<128x128xf32> to vector<128x128xbf16>
    %cst_25 = arith.constant dense<0.000000e+00> : vector<16x128xf32>
    %52 = tpu.matmul %45, %51, %cst_25 {dimension_numbers = #tpu.dot_dimension_numbers<[0], [0], [1], [1], [0, 1, 1, 1], [], []>} : vector<128x16xbf16>, vector<128x128xbf16>, vector<16x128xf32> -> vector<16x128xf32>
    %53 = arith.addf %50, %52 : vector<16x128xf32>
    %c0_26 = arith.constant 0 : index
    %c0_27 = arith.constant 0 : index
    %54 = vector.load %arg17[%c0_26, %c0_27] : memref<16x128xf32, #tpu.memory_space<vmem>>, vector<16x128xf32>
    tpu.vector_store %arg17[%c0_26, %c0_27], %53 {strides = array<i32>} : memref<16x128xf32, #tpu.memory_space<vmem>>, vector<16x128xf32>,
    %c1_i32 = arith.constant 1 : i32
    %55 = arith.cmpi eq, %arg0, %c1_i32 : i32
    %56 = arith.extui %55 : i1 to i32
    %c0_i32_28 = arith.constant 0 : i32
    %57 = arith.cmpi ne, %56, %c0_i32_28 : i32
    scf.if %57 {
      %c0_29 = arith.constant 0 : index
      %c0_30 = arith.constant 0 : index
      %58 = vector.load %arg17[%c0_29, %c0_30] : memref<16x128xf32, #tpu.memory_space<vmem>>, vector<16x128xf32>
      %c0_31 = arith.constant 0 : index
      %c0_32 = arith.constant 0 : index
      %59 = vector.load %arg11[%c0_31, %c0_32] : memref<128x128xf32, #tpu.memory_space<vmem>>, vector<128x128xf32>
      %cst_33 = arith.constant dense<0.000000e+00> : vector<16x128xf32>
      %60 = tpu.matmul %58, %59, %cst_33 {dimension_numbers = #tpu.dot_dimension_numbers<[1], [0], [0], [1], [0, 0, 1, 1], [], []>} : vector<16x128xf32>, vector<128x128xf32>, vector<16x128xf32> -> vector<16x128xf32>
      %c0_34 = arith.constant 0 : index
      %c0_35 = arith.constant 0 : index
      %61 = vector.load %arg12[%c0_34, %c0_35] : memref<1x128xf32, #tpu.memory_space<vmem>>, vector<1x128xf32>
      %62 = vector.broadcast %61 : vector<1x128xf32> to vector<16x128xf32>
      %63 = arith.addf %60, %62 : vector<16x128xf32>
      %cst_36 = arith.constant 0.000000e+00 : f32
      %64 = vector.broadcast %cst_36 : f32 to vector<16x128xf32>
      %65 = arith.maximumf %63, %64 : vector<16x128xf32>
      %66 = vector.broadcast %cst_36 : f32 to vector<16x128xf32>
      %67 = arith.subf %63, %66 : vector<16x128xf32>
      %68 = arith.cmpf one, %67, %67 : vector<16x128xf32>
      %69 = vector.broadcast %cst_36 : f32 to vector<16x128xf32>
      %70 = arith.addf %63, %69 : vector<16x128xf32>
      %71 = math.absf %67 : vector<16x128xf32>
      %cst_37 = arith.constant 0.000000e+00 : f32
      %72 = vector.broadcast %cst_37 : f32 to vector<16x128xf32>
      %73 = arith.subf %72, %71 : vector<16x128xf32>
      %74 = math.exp %73 : vector<16x128xf32>
      %75 = math.log1p %74 : vector<16x128xf32>
      %76 = arith.addf %65, %75 : vector<16x128xf32>
      %77 = arith.select %68, %70, %76 : vector<16x128xi1>, vector<16x128xf32>
      %cst_38 = arith.constant 0.693147182 : f32
      %78 = vector.broadcast %cst_38 : f32 to vector<16x128xf32>
      %79 = arith.subf %77, %78 : vector<16x128xf32>
      %c0_39 = arith.constant 0 : index
      %c0_40 = arith.constant 0 : index
      %80 = vector.load %arg13[%c0_39, %c0_40] : memref<128x128xf32, #tpu.memory_space<vmem>>, vector<128x128xf32>
      %cst_41 = arith.constant dense<0.000000e+00> : vector<16x128xf32>
      %81 = tpu.matmul %79, %80, %cst_41 {dimension_numbers = #tpu.dot_dimension_numbers<[1], [0], [0], [1], [0, 0, 1, 1], [], []>} : vector<16x128xf32>, vector<128x128xf32>, vector<16x128xf32> -> vector<16x128xf32>
      %c0_42 = arith.constant 0 : index
      %c0_43 = arith.constant 0 : index
      %82 = vector.load %arg14[%c0_42, %c0_43] : memref<1x128xf32, #tpu.memory_space<vmem>>, vector<1x128xf32>
      %83 = vector.broadcast %82 : vector<1x128xf32> to vector<16x128xf32>
      %84 = arith.addf %81, %83 : vector<16x128xf32>
      %c0_44 = arith.constant 0 : index
      %c0_45 = arith.constant 0 : index
      %85 = vector.load %arg15[%c0_44, %c0_45] : memref<16x128xf32, #tpu.memory_space<vmem>>, vector<16x128xf32>
      tpu.vector_store %arg15[%c0_44, %c0_45], %84 {strides = array<i32>} : memref<16x128xf32, #tpu.memory_space<vmem>>, vector<16x128xf32>,
    } else {
    }
    return
  }
  func.func @transform_0(%arg0: i32) -> (i32, i32) {
    %c0_i32 = arith.constant 0 : i32
    %c0_i32_0 = arith.constant 0 : i32
    %c0_i32_1 = arith.constant 0 : i32
    return %c0_i32, %c0_i32_0 : i32, i32
  }
  func.func @transform_1(%arg0: i32) -> (i32, i32) {
    %c0_i32 = arith.constant 0 : i32
    %c0_i32_0 = arith.constant 0 : i32
    return %arg0, %c0_i32 : i32, i32
  }
  func.func @transform_2(%arg0: i32) -> (i32, i32) {
    %c0_i32 = arith.constant 0 : i32
    %c0_i32_0 = arith.constant 0 : i32
    return %arg0, %c0_i32 : i32, i32
  }
  func.func @transform_3(%arg0: i32) -> (i32, i32) {
    %c0_i32 = arith.constant 0 : i32
    %c0_i32_0 = arith.constant 0 : i32
    return %arg0, %c0_i32 : i32, i32
  }
  func.func @transform_4(%arg0: i32) -> (i32, i32) {
    %c0_i32 = arith.constant 0 : i32
    %c0_i32_0 = arith.constant 0 : i32
    return %arg0, %c0_i32 : i32, i32
  }
  func.func @transform_5(%arg0: i32) -> (i32, i32) {
    %c0_i32 = arith.constant 0 : i32
    %c0_i32_0 = arith.constant 0 : i32
    %c0_i32_1 = arith.constant 0 : i32
    return %c0_i32, %c0_i32_0 : i32, i32
  }
  func.func @transform_6(%arg0: i32) -> (i32, i32) {
    %c0_i32 = arith.constant 0 : i32
    %c0_i32_0 = arith.constant 0 : i32
    %c0_i32_1 = arith.constant 0 : i32
    return %c0_i32, %c0_i32_0 : i32, i32
  }
  func.func @transform_7(%arg0: i32) -> (i32, i32) {
    %c0_i32 = arith.constant 0 : i32
    %c0_i32_0 = arith.constant 0 : i32
    %c0_i32_1 = arith.constant 0 : i32
    return %c0_i32, %c0_i32_0 : i32, i32
  }
  func.func @transform_8(%arg0: i32) -> (i32, i32) {
    %c0_i32 = arith.constant 0 : i32
    %c0_i32_0 = arith.constant 0 : i32
    %c0_i32_1 = arith.constant 0 : i32
    return %c0_i32, %c0_i32_0 : i32, i32
  }
  func.func @transform_9(%arg0: i32) -> (i32, i32) {
    %c0_i32 = arith.constant 0 : i32
    %c0_i32_0 = arith.constant 0 : i32
    %c0_i32_1 = arith.constant 0 : i32
    return %c0_i32, %c0_i32_0 : i32, i32
  }
  func.func @transform_10(%arg0: i32) -> (i32, i32) {
    %c0_i32 = arith.constant 0 : i32
    %c0_i32_0 = arith.constant 0 : i32
    %c0_i32_1 = arith.constant 0 : i32
    return %c0_i32, %c0_i32_0 : i32, i32
  }
  func.func @transform_11(%arg0: i32) -> (i32, i32) {
    %c0_i32 = arith.constant 0 : i32
    %c0_i32_0 = arith.constant 0 : i32
    %c0_i32_1 = arith.constant 0 : i32
    return %c0_i32, %c0_i32_0 : i32, i32
  }
  func.func @transform_12(%arg0: i32) -> (i32, i32) {
    %c0_i32 = arith.constant 0 : i32
    %c0_i32_0 = arith.constant 0 : i32
    %c0_i32_1 = arith.constant 0 : i32
    return %c0_i32, %c0_i32_0 : i32, i32
  }
  func.func @transform_13(%arg0: i32) -> (i32, i32) {
    %c0_i32 = arith.constant 0 : i32
    %c0_i32_0 = arith.constant 0 : i32
    %c0_i32_1 = arith.constant 0 : i32
    return %c0_i32, %c0_i32_0 : i32, i32
  }
  func.func @transform_14(%arg0: i32) -> (i32, i32) {
    %c0_i32 = arith.constant 0 : i32
    %c0_i32_0 = arith.constant 0 : i32
    %c0_i32_1 = arith.constant 0 : i32
    return %c0_i32, %c0_i32_0 : i32, i32
  }
}

</mosaic_0001>

<llo_original>
// kernel: tpu_custom_call.1
$region0: #{tpu_custom_call.1}
  #allocation0 [shape = 'u32[]', space=smem, size = 0x4, offset = 0x4, fixed_abs, tag = 'smem constant byte address 0x4 - core index']
  #allocation1 [shape = 'u32[144,128]{1,0:T(1,128)}', space=vmem, size = 0x12000, scoped, tag = 'internal scratch']
  #allocation2 [shape = 'f32[16,128]{1,0:T(8,128)}', space=vmem, size = 0x2000, scoped, tag = 'scratch operand']
  #allocation3 [shape = 'f32[16,128]{1,0:T(8,128)}', space=vmem, size = 0x2000, scoped, tag = 'scratch operand']
  %s0 = inlined_call_operand.hbm [shape: f32[16,128], index: 0, kind: input, shape index: {}]
  %s1 = inlined_call_operand.vmem [shape: f32[256,128], index: 1, kind: input, shape index: {}]
  %s2 = inlined_call_operand.vmem [shape: s32[256,1], index: 2, kind: input, shape index: {}]
  %s3 = inlined_call_operand.vmem [shape: s32[256,1], index: 3, kind: input, shape index: {}]
  %s4 = inlined_call_operand.vmem [shape: f32[256,1], index: 4, kind: input, shape index: {}]
  %s5 = inlined_call_operand.vmem [shape: f32[128,128], index: 5, kind: input, shape index: {}]
  %s6 = inlined_call_operand.vmem [shape: f32[128,128], index: 6, kind: input, shape index: {}]
  %s7 = inlined_call_operand.vmem [shape: f32[1,128], index: 7, kind: input, shape index: {}]
  %s8 = inlined_call_operand.vmem [shape: f32[128,128], index: 8, kind: input, shape index: {}]
  %s9 = inlined_call_operand.vmem [shape: f32[1,128], index: 9, kind: input, shape index: {}]
  %s10 = inlined_call_operand.vmem [shape: f32[128,128], index: 10, kind: input, shape index: {}]
  %s11 = inlined_call_operand.vmem [shape: f32[1,128], index: 11, kind: input, shape index: {}]
  %s12 = inlined_call_operand.hbm [shape: f32[128,128], index: 12, kind: input, shape index: {}]
  %s13 = inlined_call_operand.vmem [shape: f32[1,128], index: 13, kind: input, shape index: {}]
  %s14 = inlined_call_operand.hbm [shape: f32[16,128], index: 14, kind: output, shape index: {}]
  %s15 = sld [smem:[#allocation0]]
  $region105: #{tpu_custom_call.1} parent=0
    _
  %s17 = ssub.s32 1, %s15
  %s18 = scalar_select 0, %s17, %s15
  $region1: #{tpu_custom_call.1} parent=0
    #allocation4 [shape = 'u8[8192]{0}', space=vmem, size = 0x2000, scoped, tag = 'input window, operand 0, single buffered']
    #allocation5 [shape = 's32[2]{0}', space=sflag, size = 0x8, scoped, tag = 'scoped memory for tpu_custom_call.1']
    #allocation6 [shape = 's32[2]{0}', space=sflag, size = 0x8, scoped, tag = 'scoped memory for tpu_custom_call.1']
    #allocation7 [shape = 'u8[65536]{0}', space=vmem, size = 0x10000, scoped, tag = 'input window, operand 12, single buffered']
    #allocation8 [shape = 's32[1]{0}', space=sflag, size = 0x4, scoped, tag = 'scoped memory for tpu_custom_call.1']
    #allocation9 [shape = 'u8[8192]{0}', space=vmem, size = 0x2000, scoped, tag = 'output window, operand 0, single buffered']
    %19 = vsyncpa [#allocation5], 0
    %20 = vsyncpa [#allocation8], 0
    %21 = vsyncpa [#allocation6], 0
    loop: start=0, step=1, limit=4
    $region2: #{tpu_custom_call.1} parent=1 // loop_pre_header
      _
    $region3: #{tpu_custom_call.1} parent=1 // loop_header
      %s23 = sphi 0, %s27
      %p24 = scmp.ge.s32.totalorder %s23, 4
      %s31 = sphi 0, %s31
      %s33 = sphi 0, %s31
      %s34 = sphi 0, %s33
      %s48 = sphi 0, %s34
      %s54 = sphi 0, %s56
      %s57 = sphi 0, %s54
      %s58 = sphi 0, %s57
      %s74 = sphi 0, %s58
      %s80 = sphi 0, %s82
      %s83 = sphi 0, %s80
      %s84 = sphi 0, %s83
      %s100 = sphi 0, %s84
      %s106 = sphi 0, %s108
      %s109 = sphi 0, %s106
      %s110 = sphi 0, %s109
      %s126 = sphi 0, %s110
      %s132 = sphi 0, %s134
      %s135 = sphi 0, %s132
      %s136 = sphi 0, %s135
      %s152 = sphi 0, %s136
      %s156 = sphi 0, %s156
      %s158 = sphi 0, %s156
      %s159 = sphi 0, %s158
      %s173 = sphi 0, %s159
      %s177 = sphi 0, %s177
      %s179 = sphi 0, %s177
      %s180 = sphi 0, %s179
      %s194 = sphi 0, %s180
      %s198 = sphi 0, %s198
      %s200 = sphi 0, %s198
      %s201 = sphi 0, %s200
      %s215 = sphi 0, %s201
      %s219 = sphi 0, %s219
      %s221 = sphi 0, %s219
      %s222 = sphi 0, %s221
      %s236 = sphi 0, %s222
      %s240 = sphi 0, %s240
      %s242 = sphi 0, %s240
      %s243 = sphi 0, %s242
      %s257 = sphi 0, %s243
      %s261 = sphi 0, %s261
      %s263 = sphi 0, %s261
      %s264 = sphi 0, %s263
      %s278 = sphi 0, %s264
      %s282 = sphi 0, %s282
      %s284 = sphi 0, %s282
      %s285 = sphi 0, %s284
      %s299 = sphi 0, %s285
      %s303 = sphi 0, %s303
      %s305 = sphi 0, %s303
      %s306 = sphi 0, %s305
      %s320 = sphi 0, %s306
      %s324 = sphi 0, %s324
      %s326 = sphi 0, %s324
      %s327 = sphi 0, %s326
      %s341 = sphi 0, %s327
      %s345 = sphi 0, %s345
      %s347 = sphi 0, %s345
      %s348 = sphi 0, %s347
      %s362 = sphi 0, %s348
    $region4: #{tpu_custom_call.1} parent=1 // loop_header_branch
      %26 = sbr.rel (%p24) target = $region8
    $region5: #{tpu_custom_call.1} parent=1 // loop_body
      %s28 = ssub.s32 %s23, 1
      %s29 = ssub.s32 %s23, 2
      %s30 = sadd.s32 %s23, 1
      %s32 = sadd.s32 %s31, 1
      %p35 = scmp.eq.s32.totalorder %s23, 1
      %p36 = scmp.ne.s32.totalorder %s31, %s33
      %p37 = scmp.eq.s32.totalorder %s23, 0
      %p38 = por %p36, %p37
      %p39 = scmp.ne.s32.totalorder %s31, %s33
      %p40 = scmp.eq.s32.totalorder %s28, 1
      %p41 = por %p39, %p40
      %p42 = scmp.ne.s32.totalorder %s33, %s34
      %p43 = scmp.eq.s32.totalorder %s28, 0
      %p44 = por %p42, %p43
      %p45 = scmp.ne.s32.totalorder %s33, %s34
      %p46 = scmp.eq.s32.totalorder %s29, 1
      %p47 = por %p45, %p46
      %p49 = scmp.ne.s32.totalorder %s34, %s48
      %p50 = scmp.eq.s32.totalorder %s29, 0
      %p51 = por %p49, %p50
      %s52 = ssub.s32 %s23, %s30
      %p53 = scmp.eq.s32.totalorder %s52, 0
      %s55 = sadd.s32 %s54, 1
      %s56 = scalar_select %p53, %s54, %s55
      %p59 = pneg %p53
      %p60 = scmp.eq.s32.totalorder %s23, 1
      %p61 = por %p59, %p60
      %p62 = scmp.ne.s32.totalorder %s54, %s57
      %p63 = scmp.eq.s32.totalorder %s23, 0
      %p64 = por %p62, %p63
      %p65 = scmp.ne.s32.totalorder %s54, %s57
      %p66 = scmp.eq.s32.totalorder %s28, 1
      %p67 = por %p65, %p66
      %p68 = scmp.ne.s32.totalorder %s57, %s58
      %p69 = scmp.eq.s32.totalorder %s28, 0
      %p70 = por %p68, %p69
      %p71 = scmp.ne.s32.totalorder %s57, %s58
      %p72 = scmp.eq.s32.totalorder %s29, 1
      %p73 = por %p71, %p72
      %p75 = scmp.ne.s32.totalorder %s58, %s74
      %p76 = scmp.eq.s32.totalorder %s29, 0
      %p77 = por %p75, %p76
      %s78 = ssub.s32 %s23, %s30
      %p79 = scmp.eq.s32.totalorder %s78, 0
      %s81 = sadd.s32 %s80, 1
      %s82 = scalar_select %p79, %s80, %s81
      %p85 = pneg %p79
      %p86 = scmp.eq.s32.totalorder %s23, 1
      %p87 = por %p85, %p86
      %p88 = scmp.ne.s32.totalorder %s80, %s83
      %p89 = scmp.eq.s32.totalorder %s23, 0
      %p90 = por %p88, %p89
      %p91 = scmp.ne.s32.totalorder %s80, %s83
      %p92 = scmp.eq.s32.totalorder %s28, 1
      %p93 = por %p91, %p92
      %p94 = scmp.ne.s32.totalorder %s83, %s84
      %p95 = scmp.eq.s32.totalorder %s28, 0
      %p96 = por %p94, %p95
      %p97 = scmp.ne.s32.totalorder %s83, %s84
      %p98 = scmp.eq.s32.totalorder %s29, 1
      %p99 = por %p97, %p98
      %p101 = scmp.ne.s32.totalorder %s84, %s100
      %p102 = scmp.eq.s32.totalorder %s29, 0
      %p103 = por %p101, %p102
      %s104 = ssub.s32 %s23, %s30
      %p105 = scmp.eq.s32.totalorder %s104, 0
      %s107 = sadd.s32 %s106, 1
      %s108 = scalar_select %p105, %s106, %s107
      %p111 = pneg %p105
      %p112 = scmp.eq.s32.totalorder %s23, 1
      %p113 = por %p111, %p112
      %p114 = scmp.ne.s32.totalorder %s106, %s109
      %p115 = scmp.eq.s32.totalorder %s23, 0
      %p116 = por %p114, %p115
      %p117 = scmp.ne.s32.totalorder %s106, %s109
      %p118 = scmp.eq.s32.totalorder %s28, 1
      %p119 = por %p117, %p118
      %p120 = scmp.ne.s32.totalorder %s109, %s110
      %p121 = scmp.eq.s32.totalorder %s28, 0
      %p122 = por %p120, %p121
      %p123 = scmp.ne.s32.totalorder %s109, %s110
      %p124 = scmp.eq.s32.totalorder %s29, 1
      %p125 = por %p123, %p124
      %p127 = scmp.ne.s32.totalorder %s110, %s126
      %p128 = scmp.eq.s32.totalorder %s29, 0
      %p129 = por %p127, %p128
      %s130 = ssub.s32 %s23, %s30
      %p131 = scmp.eq.s32.totalorder %s130, 0
      %s133 = sadd.s32 %s132, 1
      %s134 = scalar_select %p131, %s132, %s133
      %p137 = pneg %p131
      %p138 = scmp.eq.s32.totalorder %s23, 1
      %p139 = por %p137, %p138
      %p140 = scmp.ne.s32.totalorder %s132, %s135
      %p141 = scmp.eq.s32.totalorder %s23, 0
      %p142 = por %p140, %p141
      %p143 = scmp.ne.s32.totalorder %s132, %s135
      %p144 = scmp.eq.s32.totalorder %s28, 1
      %p145 = por %p143, %p144
      %p146 = scmp.ne.s32.totalorder %s135, %s136
      %p147 = scmp.eq.s32.totalorder %s28, 0
      %p148 = por %p146, %p147
      %p149 = scmp.ne.s32.totalorder %s135, %s136
      %p150 = scmp.eq.s32.totalorder %s29, 1
      %p151 = por %p149, %p150
      %p153 = scmp.ne.s32.totalorder %s136, %s152
      %p154 = scmp.eq.s32.totalorder %s29, 0
      %p155 = por %p153, %p154
      %s157 = sadd.s32 %s156, 1
      %p160 = scmp.eq.s32.totalorder %s23, 1
      %p161 = scmp.ne.s32.totalorder %s156, %s158
      %p162 = scmp.eq.s32.totalorder %s23, 0
      %p163 = por %p161, %p162
      %p164 = scmp.ne.s32.totalorder %s156, %s158
      %p165 = scmp.eq.s32.totalorder %s28, 1
      %p166 = por %p164, %p165
      %p167 = scmp.ne.s32.totalorder %s158, %s159
      %p168 = scmp.eq.s32.totalorder %s28, 0
      %p169 = por %p167, %p168
      %p170 = scmp.ne.s32.totalorder %s158, %s159
      %p171 = scmp.eq.s32.totalorder %s29, 1
      %p172 = por %p170, %p171
      %p174 = scmp.ne.s32.totalorder %s159, %s173
      %p175 = scmp.eq.s32.totalorder %s29, 0
      %p176 = por %p174, %p175
      %s178 = sadd.s32 %s177, 1
      %p181 = scmp.eq.s32.totalorder %s23, 1
      %p182 = scmp.ne.s32.totalorder %s177, %s179
      %p183 = scmp.eq.s32.totalorder %s23, 0
      %p184 = por %p182, %p183
      %p185 = scmp.ne.s32.totalorder %s177, %s179
      %p186 = scmp.eq.s32.totalorder %s28, 1
      %p187 = por %p185, %p186
      %p188 = scmp.ne.s32.totalorder %s179, %s180
      %p189 = scmp.eq.s32.totalorder %s28, 0
      %p190 = por %p188, %p189
      %p191 = scmp.ne.s32.totalorder %s179, %s180
      %p192 = scmp.eq.s32.totalorder %s29, 1
      %p193 = por %p191, %p192
      %p195 = scmp.ne.s32.totalorder %s180, %s194
      %p196 = scmp.eq.s32.totalorder %s29, 0
      %p197 = por %p195, %p196
      %s199 = sadd.s32 %s198, 1
      %p202 = scmp.eq.s32.totalorder %s23, 1
      %p203 = scmp.ne.s32.totalorder %s198, %s200
      %p204 = scmp.eq.s32.totalorder %s23, 0
      %p205 = por %p203, %p204
      %p206 = scmp.ne.s32.totalorder %s198, %s200
      %p207 = scmp.eq.s32.totalorder %s28, 1
      %p208 = por %p206, %p207
      %p209 = scmp.ne.s32.totalorder %s200, %s201
      %p210 = scmp.eq.s32.totalorder %s28, 0
      %p211 = por %p209, %p210
      %p212 = scmp.ne.s32.totalorder %s200, %s201
      %p213 = scmp.eq.s32.totalorder %s29, 1
      %p214 = por %p212, %p213
      %p216 = scmp.ne.s32.totalorder %s201, %s215
      %p217 = scmp.eq.s32.totalorder %s29, 0
      %p218 = por %p216, %p217
      %s220 = sadd.s32 %s219, 1
      %p223 = scmp.eq.s32.totalorder %s23, 1
      %p224 = scmp.ne.s32.totalorder %s219, %s221
      %p225 = scmp.eq.s32.totalorder %s23, 0
      %p226 = por %p224, %p225
      %p227 = scmp.ne.s32.totalorder %s219, %s221
      %p228 = scmp.eq.s32.totalorder %s28, 1
      %p229 = por %p227, %p228
      %p230 = scmp.ne.s32.totalorder %s221, %s222
      %p231 = scmp.eq.s32.totalorder %s28, 0
      %p232 = por %p230, %p231
      %p233 = scmp.ne.s32.totalorder %s221, %s222
      %p234 = scmp.eq.s32.totalorder %s29, 1
      %p235 = por %p233, %p234
      %p237 = scmp.ne.s32.totalorder %s222, %s236
      %p238 = scmp.eq.s32.totalorder %s29, 0
      %p239 = por %p237, %p238
      %s241 = sadd.s32 %s240, 1
      %p244 = scmp.eq.s32.totalorder %s23, 1
      %p245 = scmp.ne.s32.totalorder %s240, %s242
      %p246 = scmp.eq.s32.totalorder %s23, 0
      %p247 = por %p245, %p246
      %p248 = scmp.ne.s32.totalorder %s240, %s242
      %p249 = scmp.eq.s32.totalorder %s28, 1
      %p250 = por %p248, %p249
      %p251 = scmp.ne.s32.totalorder %s242, %s243
      %p252 = scmp.eq.s32.totalorder %s28, 0
      %p253 = por %p251, %p252
      %p254 = scmp.ne.s32.totalorder %s242, %s243
      %p255 = scmp.eq.s32.totalorder %s29, 1
      %p256 = por %p254, %p255
      %p258 = scmp.ne.s32.totalorder %s243, %s257
      %p259 = scmp.eq.s32.totalorder %s29, 0
      %p260 = por %p258, %p259
      %s262 = sadd.s32 %s261, 1
      %p265 = scmp.eq.s32.totalorder %s23, 1
      %p266 = scmp.ne.s32.totalorder %s261, %s263
      %p267 = scmp.eq.s32.totalorder %s23, 0
      %p268 = por %p266, %p267
      %p269 = scmp.ne.s32.totalorder %s261, %s263
      %p270 = scmp.eq.s32.totalorder %s28, 1
      %p271 = por %p269, %p270
      %p272 = scmp.ne.s32.totalorder %s263, %s264
      %p273 = scmp.eq.s32.totalorder %s28, 0
      %p274 = por %p272, %p273
      %p275 = scmp.ne.s32.totalorder %s263, %s264
      %p276 = scmp.eq.s32.totalorder %s29, 1
      %p277 = por %p275, %p276
      %p279 = scmp.ne.s32.totalorder %s264, %s278
      %p280 = scmp.eq.s32.totalorder %s29, 0
      %p281 = por %p279, %p280
      %s283 = sadd.s32 %s282, 1
      %p286 = scmp.eq.s32.totalorder %s23, 1
      %p287 = scmp.ne.s32.totalorder %s282, %s284
      %p288 = scmp.eq.s32.totalorder %s23, 0
      %p289 = por %p287, %p288
      %p290 = scmp.ne.s32.totalorder %s282, %s284
      %p291 = scmp.eq.s32.totalorder %s28, 1
      %p292 = por %p290, %p291
      %p293 = scmp.ne.s32.totalorder %s284, %s285
      %p294 = scmp.eq.s32.totalorder %s28, 0
      %p295 = por %p293, %p294
      %p296 = scmp.ne.s32.totalorder %s284, %s285
      %p297 = scmp.eq.s32.totalorder %s29, 1
      %p298 = por %p296, %p297
      %p300 = scmp.ne.s32.totalorder %s285, %s299
      %p301 = scmp.eq.s32.totalorder %s29, 0
      %p302 = por %p300, %p301
      %s304 = sadd.s32 %s303, 1
      %p307 = scmp.eq.s32.totalorder %s23, 1
      %p308 = scmp.ne.s32.totalorder %s303, %s305
      %p309 = scmp.eq.s32.totalorder %s23, 0
      %p310 = por %p308, %p309
      %p311 = scmp.ne.s32.totalorder %s303, %s305
      %p312 = scmp.eq.s32.totalorder %s28, 1
      %p313 = por %p311, %p312
      %p314 = scmp.ne.s32.totalorder %s305, %s306
      %p315 = scmp.eq.s32.totalorder %s28, 0
      %p316 = por %p314, %p315
      %p317 = scmp.ne.s32.totalorder %s305, %s306
      %p318 = scmp.eq.s32.totalorder %s29, 1
      %p319 = por %p317, %p318
      %p321 = scmp.ne.s32.totalorder %s306, %s320
      %p322 = scmp.eq.s32.totalorder %s29, 0
      %p323 = por %p321, %p322
      %s325 = sadd.s32 %s324, 1
      %p328 = scmp.eq.s32.totalorder %s23, 1
      %p329 = scmp.ne.s32.totalorder %s324, %s326
      %p330 = scmp.eq.s32.totalorder %s23, 0
      %p331 = por %p329, %p330
      %p332 = scmp.ne.s32.totalorder %s324, %s326
      %p333 = scmp.eq.s32.totalorder %s28, 1
      %p334 = por %p332, %p333
      %p335 = scmp.ne.s32.totalorder %s326, %s327
      %p336 = scmp.eq.s32.totalorder %s28, 0
      %p337 = por %p335, %p336
      %p338 = scmp.ne.s32.totalorder %s326, %s327
      %p339 = scmp.eq.s32.totalorder %s29, 1
      %p340 = por %p338, %p339
      %p342 = scmp.ne.s32.totalorder %s327, %s341
      %p343 = scmp.eq.s32.totalorder %s29, 0
      %p344 = por %p342, %p343
      %s346 = sadd.s32 %s345, 1
      %p349 = scmp.eq.s32.totalorder %s23, 1
      %p350 = scmp.ne.s32.totalorder %s345, %s347
      %p351 = scmp.eq.s32.totalorder %s23, 0
      %p352 = por %p350, %p351
      %p353 = scmp.ne.s32.totalorder %s345, %s347
      %p354 = scmp.eq.s32.totalorder %s28, 1
      %p355 = por %p353, %p354
      %p356 = scmp.ne.s32.totalorder %s347, %s348
      %p357 = scmp.eq.s32.totalorder %s28, 0
      %p358 = por %p356, %p357
      %p359 = scmp.ne.s32.totalorder %s347, %s348
      %p360 = scmp.eq.s32.totalorder %s29, 1
      %p361 = por %p359, %p360
      %p363 = scmp.ne.s32.totalorder %s348, %s362
      %p364 = scmp.eq.s32.totalorder %s29, 0
      %p365 = por %p363, %p364
      %p366 = scmp.le.s32.totalorder 1, %s23
      %p367 = scmp.lt.s32.totalorder %s23, 3
      %p368 = pnand %p366, %p367
      %p369 = pneg %p368
      // Predicated region
      $region9: #{tpu_custom_call.1} parent=5 // pred_check
        _
      $region10: #{tpu_custom_call.1} parent=5 // pred_check_branch
        %371 = sbr.rel (%p368) target = $region12
      $region11: #{tpu_custom_call.1} parent=5 // pred_region
        %s372 = ssub.s32 %s23, 1
        // Predicated region
        $region13: #{tpu_custom_call.1} parent=11 // pred_check
          %p373 = pneg %p44
        $region14: #{tpu_custom_call.1} parent=11 // pred_check_branch
          %375 = sbr.rel (%p373) target = $region16
        $region15: #{tpu_custom_call.1} parent=11 // pred_region
          %s377 = ssub.s32 256, 256
          %378 = vsyncadd [#allocation5], %s377
          %s379 = sshll.u32 [#allocation4], 4
          %s380 = int_to_ptr.vmem [resolvable:$true] %s379
          %385 = dma.hbm_to_vmem [thread:$0]  %s0, 256, %s380, [#allocation5], 128, 128, 8
        $region16: #{tpu_custom_call.1} parent=11 // pred_fallthru
          _
        // Predicated region
        $region17: #{tpu_custom_call.1} parent=11 // pred_check
          %p386 = pneg %p169
        $region18: #{tpu_custom_call.1} parent=11 // pred_check_branch
          %388 = sbr.rel (%p386) target = $region20
        $region19: #{tpu_custom_call.1} parent=11 // pred_region
          _
        $region20: #{tpu_custom_call.1} parent=11 // pred_fallthru
          _
        // Predicated region
        $region21: #{tpu_custom_call.1} parent=11 // pred_check
          %p389 = pneg %p190
        $region22: #{tpu_custom_call.1} parent=11 // pred_check_branch
          %391 = sbr.rel (%p389) target = $region24
        $region23: #{tpu_custom_call.1} parent=11 // pred_region
          _
        $region24: #{tpu_custom_call.1} parent=11 // pred_fallthru
          _
        // Predicated region
        $region25: #{tpu_custom_call.1} parent=11 // pred_check
          %p392 = pneg %p211
        $region26: #{tpu_custom_call.1} parent=11 // pred_check_branch
          %394 = sbr.rel (%p392) target = $region28
        $region27: #{tpu_custom_call.1} parent=11 // pred_region
          _
        $region28: #{tpu_custom_call.1} parent=11 // pred_fallthru
          _
        // Predicated region
        $region29: #{tpu_custom_call.1} parent=11 // pred_check
          %p395 = pneg %p232
        $region30: #{tpu_custom_call.1} parent=11 // pred_check_branch
          %397 = sbr.rel (%p395) target = $region32
        $region31: #{tpu_custom_call.1} parent=11 // pred_region
          _
        $region32: #{tpu_custom_call.1} parent=11 // pred_fallthru
          _
        // Predicated region
        $region33: #{tpu_custom_call.1} parent=11 // pred_check
          %p398 = pneg %p253
        $region34: #{tpu_custom_call.1} parent=11 // pred_check_branch
          %400 = sbr.rel (%p398) target = $region36
        $region35: #{tpu_custom_call.1} parent=11 // pred_region
          _
        $region36: #{tpu_custom_call.1} parent=11 // pred_fallthru
          _
        // Predicated region
        $region37: #{tpu_custom_call.1} parent=11 // pred_check
          %p401 = pneg %p274
        $region38: #{tpu_custom_call.1} parent=11 // pred_check_branch
          %403 = sbr.rel (%p401) target = $region40
        $region39: #{tpu_custom_call.1} parent=11 // pred_region
          _
        $region40: #{tpu_custom_call.1} parent=11 // pred_fallthru
          _
        // Predicated region
        $region41: #{tpu_custom_call.1} parent=11 // pred_check
          %p404 = pneg %p295
        $region42: #{tpu_custom_call.1} parent=11 // pred_check_branch
          %406 = sbr.rel (%p404) target = $region44
        $region43: #{tpu_custom_call.1} parent=11 // pred_region
          _
        $region44: #{tpu_custom_call.1} parent=11 // pred_fallthru
          _
        // Predicated region
        $region45: #{tpu_custom_call.1} parent=11 // pred_check
          %p407 = pneg %p316
        $region46: #{tpu_custom_call.1} parent=11 // pred_check_branch
          %409 = sbr.rel (%p407) target = $region48
        $region47: #{tpu_custom_call.1} parent=11 // pred_region
          %s411 = ssub.s32 2048, 2048
          %412 = vsyncadd [#allocation8], %s411
          %s413 = sshll.u32 [#allocation7], 4
          %s414 = int_to_ptr.vmem [resolvable:$true] %s413
          %419 = dma.hbm_to_vmem [thread:$0]  %s12, 2048, %s414, [#allocation8], 128, 128, 8
        $region48: #{tpu_custom_call.1} parent=11 // pred_fallthru
          _
        // Predicated region
        $region49: #{tpu_custom_call.1} parent=11 // pred_check
          %p420 = pneg %p337
        $region50: #{tpu_custom_call.1} parent=11 // pred_check_branch
          %422 = sbr.rel (%p420) target = $region52
        $region51: #{tpu_custom_call.1} parent=11 // pred_region
          _
        $region52: #{tpu_custom_call.1} parent=11 // pred_fallthru
          _
      $region12: #{tpu_custom_call.1} parent=5 // pred_fallthru
        _
      %p423 = scmp.lt.s32.totalorder %s23, 2
      // Predicated region
      $region53: #{tpu_custom_call.1} parent=5 // pred_check
        %p424 = pneg %p423
      $region54: #{tpu_custom_call.1} parent=5 // pred_check_branch
        %426 = sbr.rel (%p424) target = $region56
      $region55: #{tpu_custom_call.1} parent=5 // pred_region
        // Predicated region
        $region57: #{tpu_custom_call.1} parent=55 // pred_check
          %p427 = pneg %p64
        $region58: #{tpu_custom_call.1} parent=55 // pred_check_branch
          %429 = sbr.rel (%p427) target = $region60
        $region59: #{tpu_custom_call.1} parent=55 // pred_region
          %s430 = smul.u32 16, %s23
          %p431 = scmp.lt.s32.totalorder %s430, 31
          %s432 = scalar_select %p431, %s430, 31
          %s433 = smul.addr %s432, 8
          %s434 = scalar_lea.vmem %s1, %s433
          %s435 = smul.u32 16, %s23
        $region60: #{tpu_custom_call.1} parent=55 // pred_fallthru
          _
        // Predicated region
        $region61: #{tpu_custom_call.1} parent=55 // pred_check
          %p436 = pneg %p90
        $region62: #{tpu_custom_call.1} parent=55 // pred_check_branch
          %438 = sbr.rel (%p436) target = $region64
        $region63: #{tpu_custom_call.1} parent=55 // pred_region
          %s439 = smul.u32 16, %s23
          %p440 = scmp.lt.s32.totalorder %s439, 31
          %s441 = scalar_select %p440, %s439, 31
          %s442 = smul.addr %s441, 8
          %s443 = scalar_lea.vmem %s2, %s442
          %s444 = smul.u32 16, %s23
        $region64: #{tpu_custom_call.1} parent=55 // pred_fallthru
          _
        // Predicated region
        $region65: #{tpu_custom_call.1} parent=55 // pred_check
          %p445 = pneg %p116
        $region66: #{tpu_custom_call.1} parent=55 // pred_check_branch
          %447 = sbr.rel (%p445) target = $region68
        $region67: #{tpu_custom_call.1} parent=55 // pred_region
          %s448 = smul.u32 16, %s23
          %p449 = scmp.lt.s32.totalorder %s448, 31
          %s450 = scalar_select %p449, %s448, 31
          %s451 = smul.addr %s450, 8
          %s452 = scalar_lea.vmem %s3, %s451
          %s453 = smul.u32 16, %s23
        $region68: #{tpu_custom_call.1} parent=55 // pred_fallthru
          _
        // Predicated region
        $region69: #{tpu_custom_call.1} parent=55 // pred_check
          %p454 = pneg %p142
        $region70: #{tpu_custom_call.1} parent=55 // pred_check_branch
          %456 = sbr.rel (%p454) target = $region72
        $region71: #{tpu_custom_call.1} parent=55 // pred_region
          %s457 = smul.u32 16, %s23
          %p458 = scmp.lt.s32.totalorder %s457, 31
          %s459 = scalar_select %p458, %s457, 31
          %s460 = smul.addr %s459, 8
          %s461 = scalar_lea.vmem %s4, %s460
          %s462 = smul.u32 16, %s23
        $region72: #{tpu_custom_call.1} parent=55 // pred_fallthru
          _
      $region56: #{tpu_custom_call.1} parent=5 // pred_fallthru
        _
      %p463 = scmp.le.s32.totalorder 1, %s23
      %p464 = scmp.lt.s32.totalorder %s23, 3
      %p465 = pnand %p463, %p464
      %p466 = pneg %p465
      // Predicated region
      $region73: #{tpu_custom_call.1} parent=5 // pred_check
        _
      $region74: #{tpu_custom_call.1} parent=5 // pred_check_branch
        %468 = sbr.rel (%p465) target = $region76
      $region75: #{tpu_custom_call.1} parent=5 // pred_region
        %s469 = ssub.s32 %s23, 1
        // Predicated region
        $region77: #{tpu_custom_call.1} parent=75 // pred_check
          %p470 = pneg %p44
        $region78: #{tpu_custom_call.1} parent=75 // pred_check_branch
          %472 = sbr.rel (%p470) target = $region80
        $region79: #{tpu_custom_call.1} parent=75 // pred_region
          %473 = dma.done [#allocation5], 256
        $region80: #{tpu_custom_call.1} parent=75 // pred_fallthru
          _
        // Predicated region
        $region81: #{tpu_custom_call.1} parent=75 // pred_check
          %p474 = pneg %p316
        $region82: #{tpu_custom_call.1} parent=75 // pred_check_branch
          %476 = sbr.rel (%p474) target = $region84
        $region83: #{tpu_custom_call.1} parent=75 // pred_region
          %477 = dma.done [#allocation8], 2048
        $region84: #{tpu_custom_call.1} parent=75 // pred_fallthru
          _
        %p478 = pneg %p44
        %p479 = pneg %p41
        %s480 = smul.u32 16, %s28
        %p481 = scmp.lt.s32.totalorder %s480, 31
        %s482 = scalar_select %p481, %s480, 31
        %s483 = smul.addr %s482, 8
        %s484 = scalar_lea.vmem %s1, %s483
        %p485 = pneg %p70
        %p486 = pneg %p67
        %s487 = smul.u32 16, %s28
        %p488 = scmp.lt.s32.totalorder %s487, 31
        %s489 = scalar_select %p488, %s487, 31
        %s490 = smul.addr %s489, 8
        %s491 = scalar_lea.vmem %s2, %s490
        %p492 = pneg %p96
        %p493 = pneg %p93
        %s494 = smul.u32 16, %s28
        %p495 = scmp.lt.s32.totalorder %s494, 31
        %s496 = scalar_select %p495, %s494, 31
        %s497 = smul.addr %s496, 8
        %s498 = scalar_lea.vmem %s3, %s497
        %p499 = pneg %p122
        %p500 = pneg %p119
        %s501 = smul.u32 16, %s28
        %p502 = scmp.lt.s32.totalorder %s501, 31
        %s503 = scalar_select %p502, %s501, 31
        %s504 = smul.addr %s503, 8
        %s505 = scalar_lea.vmem %s4, %s504
        %p506 = pneg %p148
        %p507 = pneg %p145
        %p508 = pneg %p169
        %p509 = pneg %p166
        %p510 = pneg %p190
        %p511 = pneg %p187
        %p512 = pneg %p211
        %p513 = pneg %p208
        %p514 = pneg %p232
        %p515 = pneg %p229
        %p516 = pneg %p253
        %p517 = pneg %p250
        %p518 = pneg %p274
        %p519 = pneg %p271
        %p520 = pneg %p295
        %p521 = pneg %p292
        %p522 = pneg %p316
        %p523 = pneg %p313
        %p524 = pneg %p337
        %p525 = pneg %p334
        %p526 = pneg %p358
        %p527 = pneg %p355
        %s528 = smul.u32 16, %s28
        %p529 = scmp.lt.s32.totalorder %s528, 31
        %s530 = scalar_select %p529, %s528, 31
        %s531 = smul.addr %s530, 8
        %s532 = scalar_lea.vmem %s1, %s531
        %s533 = smul.u32 16, %s28
        %s534 = smul.u32 16, %s28
        %p535 = scmp.lt.s32.totalorder %s534, 31
        %s536 = scalar_select %p535, %s534, 31
        %s537 = smul.addr %s536, 8
        %s538 = scalar_lea.vmem %s2, %s537
        %s539 = smul.u32 16, %s28
        %s540 = smul.u32 16, %s28
        %p541 = scmp.lt.s32.totalorder %s540, 31
        %s542 = scalar_select %p541, %s540, 31
        %s543 = smul.addr %s542, 8
        %s544 = scalar_lea.vmem %s3, %s543
        %s545 = smul.u32 16, %s28
        %s546 = smul.u32 16, %s28
        %p547 = scmp.lt.s32.totalorder %s546, 31
        %s548 = scalar_select %p547, %s546, 31
        %s549 = smul.addr %s548, 8
        %s550 = scalar_lea.vmem %s4, %s549
        %s551 = smul.u32 16, %s28
        %p553 = scmp.eq.s32.totalorder %s28, 0
        // Predicated region
        $region85: #{tpu_custom_call.1} parent=75 // pred_check
          %p554 = pneg %p553
        $region86: #{tpu_custom_call.1} parent=75 // pred_check_branch
          %556 = sbr.rel (%p554) target = $region88
        $region87: #{tpu_custom_call.1} parent=75 // pred_region
          %v557 = vld [vmem:[#allocation4] sm:$0xff]
          %v558 = vld [vmem:[#allocation4 + $0x8] sm:$0xff]
          %v559 = vld [vmem:[%s5] sm:$0xff]
          %v560 = vld [vmem:[%s5 + $0x8] sm:$0xff]
          %v561 = vld [vmem:[%s5 + $0x10] sm:$0xff]
          %v562 = vld [vmem:[%s5 + $0x18] sm:$0xff]
          %v563 = vld [vmem:[%s5 + $0x20] sm:$0xff]
          %v564 = vld [vmem:[%s5 + $0x28] sm:$0xff]
          %v565 = vld [vmem:[%s5 + $0x30] sm:$0xff]
          %v566 = vld [vmem:[%s5 + $0x38] sm:$0xff]
          %v567 = vld [vmem:[%s5 + $0x40] sm:$0xff]
          %v568 = vld [vmem:[%s5 + $0x48] sm:$0xff]
          %v569 = vld [vmem:[%s5 + $0x50] sm:$0xff]
          %v570 = vld [vmem:[%s5 + $0x58] sm:$0xff]
          %v571 = vld [vmem:[%s5 + $0x60] sm:$0xff]
          %v572 = vld [vmem:[%s5 + $0x68] sm:$0xff]
          %v573 = vld [vmem:[%s5 + $0x70] sm:$0xff]
          %v574 = vld [vmem:[%s5 + $0x78] sm:$0xff]
          %575 = vmatprep.subr.mxu0 0.0
          %576 = vmatpush1.msra.mxu0 %v574
          %577 = vmatprep.subr.mxu0 0.0
          %578 = vmatpush1.msra.mxu0 %v573
          %579 = vmatprep.subr.mxu0 0.0
          %580 = vmatpush1.msra.mxu0 %v572
          %581 = vmatprep.subr.mxu0 0.0
          %582 = vmatpush1.msra.mxu0 %v571
          %583 = vmatprep.subr.mxu0 0.0
          %584 = vmatpush1.msra.mxu0 %v570
          %585 = vmatprep.subr.mxu0 0.0
          %586 = vmatpush1.msra.mxu0 %v569
          %587 = vmatprep.subr.mxu0 0.0
          %588 = vmatpush1.msra.mxu0 %v568
          %589 = vmatprep.subr.mxu0 0.0
          %590 = vmatpush1.msra.mxu0 %v567
          %591 = vmatprep.subr.mxu0 0.0
          %592 = vmatpush1.msra.mxu0 %v566
          %593 = vmatprep.subr.mxu0 0.0
          %594 = vmatpush1.msra.mxu0 %v565
          %595 = vmatprep.subr.mxu0 0.0
          %596 = vmatpush1.msra.mxu0 %v564
          %597 = vmatprep.subr.mxu0 0.0
          %598 = vmatpush1.msra.mxu0 %v563
          %599 = vmatprep.subr.mxu0 0.0
          %600 = vmatpush1.msra.mxu0 %v562
          %601 = vmatprep.subr.mxu0 0.0
          %602 = vmatpush1.msra.mxu0 %v561
          %603 = vmatprep.subr.mxu0 0.0
          %604 = vmatpush1.msra.mxu0 %v560
          %605 = vmatprep.subr.mxu0 0.0
          %606 = vmatpush1.msra.mxu0 %v559
          %607 = vmatprep.subr.mxu0 0.0
          %608 = vmatpush2.msra.mxu0 0.0
          %609 = vmatprep.subr.mxu0 0.0
          %610 = vmatpush2.msra.mxu0 0.0
          %611 = vmatprep.subr.mxu0 0.0
          %612 = vmatpush2.msra.mxu0 0.0
          %613 = vmatprep.subr.mxu0 0.0
          %614 = vmatpush2.msra.mxu0 0.0
          %615 = vmatprep.subr.mxu0 0.0
          %616 = vmatpush2.msra.mxu0 0.0
          %617 = vmatprep.subr.mxu0 0.0
          %618 = vmatpush2.msra.mxu0 0.0
          %619 = vmatprep.subr.mxu0 0.0
          %620 = vmatpush2.msra.mxu0 0.0
          %621 = vmatprep.subr.mxu0 0.0
          %622 = vmatpush2.msra.mxu0 0.0
          %623 = vmatprep.subr.mxu0 0.0
          %624 = vmatpush2.msra.mxu0 0.0
          %625 = vmatprep.subr.mxu0 0.0
          %626 = vmatpush2.msra.mxu0 0.0
          %627 = vmatprep.subr.mxu0 0.0
          %628 = vmatpush2.msra.mxu0 0.0
          %629 = vmatprep.subr.mxu0 0.0
          %630 = vmatpush2.msra.mxu0 0.0
          %631 = vmatprep.subr.mxu0 0.0
          %632 = vmatpush2.msra.mxu0 0.0
          %633 = vmatprep.subr.mxu0 0.0
          %634 = vmatpush2.msra.mxu0 0.0
          %635 = vmatprep.subr.mxu0 0.0
          %636 = vmatpush2.msra.mxu0 0.0
          %637 = vmatprep.subr.mxu0 0.0
          %638 = vmatpush2.msra.mxu0 0.0
          %639 = vmatprep.mubr.f32.mxu0 0.0
          %640 = vmatmul.mubr.f32.gmra.mxu0 %v557
          %v641 = vpop.f32.mrf.mxu0
          %v642 = vadd.f32 0.0, %v641
          %v643 = vpop.f32.mrf.mxu0
          %644 = vmatprep.mubr.f32.mxu0 0.0
          %645 = vmatmul.mubr.f32.gmra.mxu0 %v558
          %v646 = vpop.f32.mrf.mxu0
          %v647 = vadd.f32 0.0, %v646
          %v648 = vpop.f32.mrf.mxu0
          %649 = vdwg.mxu0
          %650 = vst [vmem:[#allocation2] sm:$0xff] %v642
          %651 = vst [vmem:[#allocation2 + $0x8] sm:$0xff] %v647
          %652 = vst [vmem:[#allocation3] sm:$0xff] 0.0
          %653 = vst [vmem:[#allocation3 + $0x8] sm:$0xff] 0.0
        $region88: #{tpu_custom_call.1} parent=75 // pred_fallthru
          _
        %v654 = vld [vmem:[%s532] sm:$0xff]
        %v655 = vld [vmem:[%s532 + $0x8] sm:$0xff]
        %v656 = vld [vmem:[%s532 + $0x10] sm:$0xff]
        %v657 = vld [vmem:[%s532 + $0x18] sm:$0xff]
        %v658 = vld [vmem:[%s532 + $0x20] sm:$0xff]
        %v659 = vld [vmem:[%s532 + $0x28] sm:$0xff]
        %v660 = vld [vmem:[%s532 + $0x30] sm:$0xff]
        %v661 = vld [vmem:[%s532 + $0x38] sm:$0xff]
        %v662 = vld [vmem:[%s532 + $0x40] sm:$0xff]
        %v663 = vld [vmem:[%s532 + $0x48] sm:$0xff]
        %v664 = vld [vmem:[%s532 + $0x50] sm:$0xff]
        %v665 = vld [vmem:[%s532 + $0x58] sm:$0xff]
        %v666 = vld [vmem:[%s532 + $0x60] sm:$0xff]
        %v667 = vld [vmem:[%s532 + $0x68] sm:$0xff]
        %v668 = vld [vmem:[%s532 + $0x70] sm:$0xff]
        %v669 = vld [vmem:[%s532 + $0x78] sm:$0xff]
        %v670 = vld [vmem:[%s6] sm:$0xff]
        %v671 = vld [vmem:[%s6 + $0x8] sm:$0xff]
        %v672 = vld [vmem:[%s6 + $0x10] sm:$0xff]
        %v673 = vld [vmem:[%s6 + $0x18] sm:$0xff]
        %v674 = vld [vmem:[%s6 + $0x20] sm:$0xff]
        %v675 = vld [vmem:[%s6 + $0x28] sm:$0xff]
        %v676 = vld [vmem:[%s6 + $0x30] sm:$0xff]
        %v677 = vld [vmem:[%s6 + $0x38] sm:$0xff]
        %v678 = vld [vmem:[%s6 + $0x40] sm:$0xff]
        %v679 = vld [vmem:[%s6 + $0x48] sm:$0xff]
        %v680 = vld [vmem:[%s6 + $0x50] sm:$0xff]
        %v681 = vld [vmem:[%s6 + $0x58] sm:$0xff]
        %v682 = vld [vmem:[%s6 + $0x60] sm:$0xff]
        %v683 = vld [vmem:[%s6 + $0x68] sm:$0xff]
        %v684 = vld [vmem:[%s6 + $0x70] sm:$0xff]
        %v685 = vld [vmem:[%s6 + $0x78] sm:$0xff]
        %v686 = vld [vmem:[%s7] sm:$0x1]
        %v688 = vlaneseq
        %v689 = vshrl.u32 %v688, 7
        %v690 = vsub.s32 0, %v689
        %v691 = vrot.slane %v686, %v690
        %693 = vmatprep.subr.mxu0 0.0
        %694 = vmatpush1.msra.mxu0 %v685
        %695 = vmatprep.subr.mxu0 0.0
        %696 = vmatpush1.msra.mxu0 %v684
        %697 = vmatprep.subr.mxu0 0.0
        %698 = vmatpush1.msra.mxu0 %v683
        %699 = vmatprep.subr.mxu0 0.0
        %700 = vmatpush1.msra.mxu0 %v682
        %701 = vmatprep.subr.mxu0 0.0
        %702 = vmatpush1.msra.mxu0 %v681
        %703 = vmatprep.subr.mxu0 0.0
        %704 = vmatpush1.msra.mxu0 %v680
        %705 = vmatprep.subr.mxu0 0.0
        %706 = vmatpush1.msra.mxu0 %v679
        %707 = vmatprep.subr.mxu0 0.0
        %708 = vmatpush1.msra.mxu0 %v678
        %709 = vmatprep.subr.mxu0 0.0
        %710 = vmatpush1.msra.mxu0 %v677
        %711 = vmatprep.subr.mxu0 0.0
        %712 = vmatpush1.msra.mxu0 %v676
        %713 = vmatprep.subr.mxu0 0.0
        %714 = vmatpush1.msra.mxu0 %v675
        %715 = vmatprep.subr.mxu0 0.0
        %716 = vmatpush1.msra.mxu0 %v674
        %717 = vmatprep.subr.mxu0 0.0
        %718 = vmatpush1.msra.mxu0 %v673
        %719 = vmatprep.subr.mxu0 0.0
        %720 = vmatpush1.msra.mxu0 %v672
        %721 = vmatprep.subr.mxu0 0.0
        %722 = vmatpush1.msra.mxu0 %v671
        %723 = vmatprep.subr.mxu0 0.0
        %724 = vmatpush1.msra.mxu0 %v670
        %725 = vmatprep.subr.mxu0 0.0
        %726 = vmatpush2.msra.mxu0 0.0
        %727 = vmatprep.subr.mxu0 0.0
        %728 = vmatpush2.msra.mxu0 0.0
        %729 = vmatprep.subr.mxu0 0.0
        %730 = vmatpush2.msra.mxu0 0.0
        %731 = vmatprep.subr.mxu0 0.0
        %732 = vmatpush2.msra.mxu0 0.0
        %733 = vmatprep.subr.mxu0 0.0
        %734 = vmatpush2.msra.mxu0 0.0
        %735 = vmatprep.subr.mxu0 0.0
        %736 = vmatpush2.msra.mxu0 0.0
        %737 = vmatprep.subr.mxu0 0.0
        %738 = vmatpush2.msra.mxu0 0.0
        %739 = vmatprep.subr.mxu0 0.0
        %740 = vmatpush2.msra.mxu0 0.0
        %741 = vmatprep.subr.mxu0 0.0
        %742 = vmatpush2.msra.mxu0 0.0
        %743 = vmatprep.subr.mxu0 0.0
        %744 = vmatpush2.msra.mxu0 0.0
        %745 = vmatprep.subr.mxu0 0.0
        %746 = vmatpush2.msra.mxu0 0.0
        %747 = vmatprep.subr.mxu0 0.0
        %748 = vmatpush2.msra.mxu0 0.0
        %749 = vmatprep.subr.mxu0 0.0
        %750 = vmatpush2.msra.mxu0 0.0
        %751 = vmatprep.subr.mxu0 0.0
        %752 = vmatpush2.msra.mxu0 0.0
        %753 = vmatprep.subr.mxu0 0.0
        %754 = vmatpush2.msra.mxu0 0.0
        %755 = vmatprep.subr.mxu0 0.0
        %756 = vmatpush2.msra.mxu0 0.0
        %757 = vmatprep.mubr.f32.mxu0 0.0
        %758 = vmatmul.mubr.f32.gmra.mxu0 %v654
        %v759 = vpop.f32.mrf.mxu0
        %v760 = vadd.f32 %v691, %v759
        %v761 = vpop.f32.mrf.mxu0
        %762 = vmatprep.mubr.f32.mxu0 0.0
        %763 = vmatmul.mubr.f32.gmra.mxu0 %v655
        %v764 = vpop.f32.mrf.mxu0
        %v765 = vadd.f32 %v691, %v764
        %v766 = vpop.f32.mrf.mxu0
        %767 = vmatprep.mubr.f32.mxu0 0.0
        %768 = vmatmul.mubr.f32.gmra.mxu0 %v656
        %v769 = vpop.f32.mrf.mxu0
        %v770 = vadd.f32 %v691, %v769
        %v771 = vpop.f32.mrf.mxu0
        %772 = vmatprep.mubr.f32.mxu0 0.0
        %773 = vmatmul.mubr.f32.gmra.mxu0 %v657
        %v774 = vpop.f32.mrf.mxu0
        %v775 = vadd.f32 %v691, %v774
        %v776 = vpop.f32.mrf.mxu0
        %777 = vmatprep.mubr.f32.mxu0 0.0
        %778 = vmatmul.mubr.f32.gmra.mxu0 %v658
        %v779 = vpop.f32.mrf.mxu0
        %v780 = vadd.f32 %v691, %v779
        %v781 = vpop.f32.mrf.mxu0
        %782 = vmatprep.mubr.f32.mxu0 0.0
        %783 = vmatmul.mubr.f32.gmra.mxu0 %v659
        %v784 = vpop.f32.mrf.mxu0
        %v785 = vadd.f32 %v691, %v784
        %v786 = vpop.f32.mrf.mxu0
        %787 = vmatprep.mubr.f32.mxu0 0.0
        %788 = vmatmul.mubr.f32.gmra.mxu0 %v660
        %v789 = vpop.f32.mrf.mxu0
        %v790 = vadd.f32 %v691, %v789
        %v791 = vpop.f32.mrf.mxu0
        %792 = vmatprep.mubr.f32.mxu0 0.0
        %793 = vmatmul.mubr.f32.gmra.mxu0 %v661
        %v794 = vpop.f32.mrf.mxu0
        %v795 = vadd.f32 %v691, %v794
        %v796 = vpop.f32.mrf.mxu0
        %797 = vmatprep.mubr.f32.mxu0 0.0
        %798 = vmatmul.mubr.f32.gmra.mxu0 %v662
        %v799 = vpop.f32.mrf.mxu0
        %v800 = vadd.f32 %v691, %v799
        %v801 = vpop.f32.mrf.mxu0
        %802 = vmatprep.mubr.f32.mxu0 0.0
        %803 = vmatmul.mubr.f32.gmra.mxu0 %v663
        %v804 = vpop.f32.mrf.mxu0
        %v805 = vadd.f32 %v691, %v804
        %v806 = vpop.f32.mrf.mxu0
        %807 = vmatprep.mubr.f32.mxu0 0.0
        %808 = vmatmul.mubr.f32.gmra.mxu0 %v664
        %v809 = vpop.f32.mrf.mxu0
        %v810 = vadd.f32 %v691, %v809
        %v811 = vpop.f32.mrf.mxu0
        %812 = vmatprep.mubr.f32.mxu0 0.0
        %813 = vmatmul.mubr.f32.gmra.mxu0 %v665
        %v814 = vpop.f32.mrf.mxu0
        %v815 = vadd.f32 %v691, %v814
        %v816 = vpop.f32.mrf.mxu0
        %817 = vmatprep.mubr.f32.mxu0 0.0
        %818 = vmatmul.mubr.f32.gmra.mxu0 %v666
        %v819 = vpop.f32.mrf.mxu0
        %v820 = vadd.f32 %v691, %v819
        %v821 = vpop.f32.mrf.mxu0
        %822 = vmatprep.mubr.f32.mxu0 0.0
        %823 = vmatmul.mubr.f32.gmra.mxu0 %v667
        %v824 = vpop.f32.mrf.mxu0
        %v825 = vadd.f32 %v691, %v824
        %v826 = vpop.f32.mrf.mxu0
        %827 = vmatprep.mubr.f32.mxu0 0.0
        %828 = vmatmul.mubr.f32.gmra.mxu0 %v668
        %v829 = vpop.f32.mrf.mxu0
        %v830 = vadd.f32 %v691, %v829
        %v831 = vpop.f32.mrf.mxu0
        %832 = vmatprep.mubr.f32.mxu0 0.0
        %833 = vmatmul.mubr.f32.gmra.mxu0 %v669
        %v834 = vpop.f32.mrf.mxu0
        %v835 = vadd.f32 %v691, %v834
        %v836 = vpop.f32.mrf.mxu0
        %837 = vdwg.mxu0
        %v838 = vmax.f32 %v760, 0.0
        %v839 = vmax.f32 %v765, 0.0
        %v840 = vmax.f32 %v770, 0.0
        %v841 = vmax.f32 %v775, 0.0
        %v842 = vmax.f32 %v780, 0.0
        %v843 = vmax.f32 %v785, 0.0
        %v844 = vmax.f32 %v790, 0.0
        %v845 = vmax.f32 %v795, 0.0
        %v846 = vmax.f32 %v800, 0.0
        %v847 = vmax.f32 %v805, 0.0
        %v848 = vmax.f32 %v810, 0.0
        %v849 = vmax.f32 %v815, 0.0
        %v850 = vmax.f32 %v820, 0.0
        %v851 = vmax.f32 %v825, 0.0
        %v852 = vmax.f32 %v830, 0.0
        %v853 = vmax.f32 %v835, 0.0
        %vm854 = vcmp.ne.f32.partialorder %v760, %v760
        %vm855 = vcmp.ne.f32.partialorder %v765, %v765
        %vm856 = vcmp.ne.f32.partialorder %v770, %v770
        %vm857 = vcmp.ne.f32.partialorder %v775, %v775
        %vm858 = vcmp.ne.f32.partialorder %v780, %v780
        %vm859 = vcmp.ne.f32.partialorder %v785, %v785
        %vm860 = vcmp.ne.f32.partialorder %v790, %v790
        %vm861 = vcmp.ne.f32.partialorder %v795, %v795
        %vm862 = vcmp.ne.f32.partialorder %v800, %v800
        %vm863 = vcmp.ne.f32.partialorder %v805, %v805
        %vm864 = vcmp.ne.f32.partialorder %v810, %v810
        %vm865 = vcmp.ne.f32.partialorder %v815, %v815
        %vm866 = vcmp.ne.f32.partialorder %v820, %v820
        %vm867 = vcmp.ne.f32.partialorder %v825, %v825
        %vm868 = vcmp.ne.f32.partialorder %v830, %v830
        %vm869 = vcmp.ne.f32.partialorder %v835, %v835
        %v870 = vadd.f32 %v760, 0.0
        %v871 = vadd.f32 %v765, 0.0
        %v872 = vadd.f32 %v770, 0.0
        %v873 = vadd.f32 %v775, 0.0
        %v874 = vadd.f32 %v780, 0.0
        %v875 = vadd.f32 %v785, 0.0
        %v876 = vadd.f32 %v790, 0.0
        %v877 = vadd.f32 %v795, 0.0
        %v878 = vadd.f32 %v800, 0.0
        %v879 = vadd.f32 %v805, 0.0
        %v880 = vadd.f32 %v810, 0.0
        %v881 = vadd.f32 %v815, 0.0
        %v882 = vadd.f32 %v820, 0.0
        %v883 = vadd.f32 %v825, 0.0
        %v884 = vadd.f32 %v830, 0.0
        %v885 = vadd.f32 %v835, 0.0
        %v886 = vand.u32 2147483647, %v760
        %v887 = vand.u32 2147483647, %v765
        %v888 = vand.u32 2147483647, %v770
        %v889 = vand.u32 2147483647, %v775
        %v890 = vand.u32 2147483647, %v780
        %v891 = vand.u32 2147483647, %v785
        %v892 = vand.u32 2147483647, %v790
        %v893 = vand.u32 2147483647, %v795
        %v894 = vand.u32 2147483647, %v800
        %v895 = vand.u32 2147483647, %v805
        %v896 = vand.u32 2147483647, %v810
        %v897 = vand.u32 2147483647, %v815
        %v898 = vand.u32 2147483647, %v820
        %v899 = vand.u32 2147483647, %v825
        %v900 = vand.u32 2147483647, %v830
        %v901 = vand.u32 2147483647, %v835
        %v902 = vsub.f32 0.0, %v886
        %v903 = vsub.f32 0.0, %v887
        %v904 = vsub.f32 0.0, %v888
        %v905 = vsub.f32 0.0, %v889
        %v906 = vsub.f32 0.0, %v890
        %v907 = vsub.f32 0.0, %v891
        %v908 = vsub.f32 0.0, %v892
        %v909 = vsub.f32 0.0, %v893
        %v910 = vsub.f32 0.0, %v894
        %v911 = vsub.f32 0.0, %v895
        %v912 = vsub.f32 0.0, %v896
        %v913 = vsub.f32 0.0, %v897
        %v914 = vsub.f32 0.0, %v898
        %v915 = vsub.f32 0.0, %v899
        %v916 = vsub.f32 0.0, %v900
        %v917 = vsub.f32 0.0, %v901
        %v918 = vmul.f32 %v902, 1.442695
        %v919 = vpow.pop %v918
        %v920 = vmul.f32 %v903, 1.442695
        %v921 = vpow.pop %v920
        %v922 = vmul.f32 %v904, 1.442695
        %v923 = vpow.pop %v922
        %v924 = vmul.f32 %v905, 1.442695
        %v925 = vpow.pop %v924
        %v926 = vmul.f32 %v906, 1.442695
        %v927 = vpow.pop %v926
        %v928 = vmul.f32 %v907, 1.442695
        %v929 = vpow.pop %v928
        %v930 = vmul.f32 %v908, 1.442695
        %v931 = vpow.pop %v930
        %v932 = vmul.f32 %v909, 1.442695
        %v933 = vpow.pop %v932
        %v934 = vmul.f32 %v910, 1.442695
        %v935 = vpow.pop %v934
        %v936 = vmul.f32 %v911, 1.442695
        %v937 = vpow.pop %v936
        %v938 = vmul.f32 %v912, 1.442695
        %v939 = vpow.pop %v938
        %v940 = vmul.f32 %v913, 1.442695
        %v941 = vpow.pop %v940
        %v942 = vmul.f32 %v914, 1.442695
        %v943 = vpow.pop %v942
        %v944 = vmul.f32 %v915, 1.442695
        %v945 = vpow.pop %v944
        %v946 = vmul.f32 %v916, 1.442695
        %v947 = vpow.pop %v946
        %v948 = vmul.f32 %v917, 1.442695
        %v949 = vpow.pop %v948
        %v950 = vadd.f32 %v919, 1.0
        %v951 = vlog2.pop %v950
        %v952 = vmul.f32 %v951, 0.6931472
        %v953 = vmul.f32 -0.5, %v919
        %v954 = vadd.f32 %v953, 1.0
        %v955 = vmul.f32 %v954, %v919
        %v956 = vand.u32 2147483647, %v919
        %vm957 = vcmp.lt.f32.partialorder %v956, 0.0004427343
        %v958 = vsel %vm957, %v955, %v952
        %v959 = vadd.f32 %v921, 1.0
        %v960 = vlog2.pop %v959
        %v961 = vmul.f32 %v960, 0.6931472
        %v962 = vmul.f32 -0.5, %v921
        %v963 = vadd.f32 %v962, 1.0
        %v964 = vmul.f32 %v963, %v921
        %v965 = vand.u32 2147483647, %v921
        %vm966 = vcmp.lt.f32.partialorder %v965, 0.0004427343
        %v967 = vsel %vm966, %v964, %v961
        %v968 = vadd.f32 %v923, 1.0
        %v969 = vlog2.pop %v968
        %v970 = vmul.f32 %v969, 0.6931472
        %v971 = vmul.f32 -0.5, %v923
        %v972 = vadd.f32 %v971, 1.0
        %v973 = vmul.f32 %v972, %v923
        %v974 = vand.u32 2147483647, %v923
        %vm975 = vcmp.lt.f32.partialorder %v974, 0.0004427343
        %v976 = vsel %vm975, %v973, %v970
        %v977 = vadd.f32 %v925, 1.0
        %v978 = vlog2.pop %v977
        %v979 = vmul.f32 %v978, 0.6931472
        %v980 = vmul.f32 -0.5, %v925
        %v981 = vadd.f32 %v980, 1.0
        %v982 = vmul.f32 %v981, %v925
        %v983 = vand.u32 2147483647, %v925
        %vm984 = vcmp.lt.f32.partialorder %v983, 0.0004427343
        %v985 = vsel %vm984, %v982, %v979
        %v986 = vadd.f32 %v927, 1.0
        %v987 = vlog2.pop %v986
        %v988 = vmul.f32 %v987, 0.6931472
        %v989 = vmul.f32 -0.5, %v927
        %v990 = vadd.f32 %v989, 1.0
        %v991 = vmul.f32 %v990, %v927
        %v992 = vand.u32 2147483647, %v927
        %vm993 = vcmp.lt.f32.partialorder %v992, 0.0004427343
        %v994 = vsel %vm993, %v991, %v988
        %v995 = vadd.f32 %v929, 1.0
        %v996 = vlog2.pop %v995
        %v997 = vmul.f32 %v996, 0.6931472
        %v998 = vmul.f32 -0.5, %v929
        %v999 = vadd.f32 %v998, 1.0
        %v1000 = vmul.f32 %v999, %v929
        %v1001 = vand.u32 2147483647, %v929
        %vm1002 = vcmp.lt.f32.partialorder %v1001, 0.0004427343
        %v1003 = vsel %vm1002, %v1000, %v997
        %v1004 = vadd.f32 %v931, 1.0
        %v1005 = vlog2.pop %v1004
        %v1006 = vmul.f32 %v1005, 0.6931472
        %v1007 = vmul.f32 -0.5, %v931
        %v1008 = vadd.f32 %v1007, 1.0
        %v1009 = vmul.f32 %v1008, %v931
        %v1010 = vand.u32 2147483647, %v931
        %vm1011 = vcmp.lt.f32.partialorder %v1010, 0.0004427343
        %v1012 = vsel %vm1011, %v1009, %v1006
        %v1013 = vadd.f32 %v933, 1.0
        %v1014 = vlog2.pop %v1013
        %v1015 = vmul.f32 %v1014, 0.6931472
        %v1016 = vmul.f32 -0.5, %v933
        %v1017 = vadd.f32 %v1016, 1.0
        %v1018 = vmul.f32 %v1017, %v933
        %v1019 = vand.u32 2147483647, %v933
        %vm1020 = vcmp.lt.f32.partialorder %v1019, 0.0004427343
        %v1021 = vsel %vm1020, %v1018, %v1015
        %v1022 = vadd.f32 %v935, 1.0
        %v1023 = vlog2.pop %v1022
        %v1024 = vmul.f32 %v1023, 0.6931472
        %v1025 = vmul.f32 -0.5, %v935
        %v1026 = vadd.f32 %v1025, 1.0
        %v1027 = vmul.f32 %v1026, %v935
        %v1028 = vand.u32 2147483647, %v935
        %vm1029 = vcmp.lt.f32.partialorder %v1028, 0.0004427343
        %v1030 = vsel %vm1029, %v1027, %v1024
        %v1031 = vadd.f32 %v937, 1.0
        %v1032 = vlog2.pop %v1031
        %v1033 = vmul.f32 %v1032, 0.6931472
        %v1034 = vmul.f32 -0.5, %v937
        %v1035 = vadd.f32 %v1034, 1.0
        %v1036 = vmul.f32 %v1035, %v937
        %v1037 = vand.u32 2147483647, %v937
        %vm1038 = vcmp.lt.f32.partialorder %v1037, 0.0004427343
        %v1039 = vsel %vm1038, %v1036, %v1033
        %v1040 = vadd.f32 %v939, 1.0
        %v1041 = vlog2.pop %v1040
        %v1042 = vmul.f32 %v1041, 0.6931472
        %v1043 = vmul.f32 -0.5, %v939
        %v1044 = vadd.f32 %v1043, 1.0
        %v1045 = vmul.f32 %v1044, %v939
        %v1046 = vand.u32 2147483647, %v939
        %vm1047 = vcmp.lt.f32.partialorder %v1046, 0.0004427343
        %v1048 = vsel %vm1047, %v1045, %v1042
        %v1049 = vadd.f32 %v941, 1.0
        %v1050 = vlog2.pop %v1049
        %v1051 = vmul.f32 %v1050, 0.6931472
        %v1052 = vmul.f32 -0.5, %v941
        %v1053 = vadd.f32 %v1052, 1.0
        %v1054 = vmul.f32 %v1053, %v941
        %v1055 = vand.u32 2147483647, %v941
        %vm1056 = vcmp.lt.f32.partialorder %v1055, 0.0004427343
        %v1057 = vsel %vm1056, %v1054, %v1051
        %v1058 = vadd.f32 %v943, 1.0
        %v1059 = vlog2.pop %v1058
        %v1060 = vmul.f32 %v1059, 0.6931472
        %v1061 = vmul.f32 -0.5, %v943
        %v1062 = vadd.f32 %v1061, 1.0
        %v1063 = vmul.f32 %v1062, %v943
        %v1064 = vand.u32 2147483647, %v943
        %vm1065 = vcmp.lt.f32.partialorder %v1064, 0.0004427343
        %v1066 = vsel %vm1065, %v1063, %v1060
        %v1067 = vadd.f32 %v945, 1.0
        %v1068 = vlog2.pop %v1067
        %v1069 = vmul.f32 %v1068, 0.6931472
        %v1070 = vmul.f32 -0.5, %v945
        %v1071 = vadd.f32 %v1070, 1.0
        %v1072 = vmul.f32 %v1071, %v945
        %v1073 = vand.u32 2147483647, %v945
        %vm1074 = vcmp.lt.f32.partialorder %v1073, 0.0004427343
        %v1075 = vsel %vm1074, %v1072, %v1069
        %v1076 = vadd.f32 %v947, 1.0
        %v1077 = vlog2.pop %v1076
        %v1078 = vmul.f32 %v1077, 0.6931472
        %v1079 = vmul.f32 -0.5, %v947
        %v1080 = vadd.f32 %v1079, 1.0
        %v1081 = vmul.f32 %v1080, %v947
        %v1082 = vand.u32 2147483647, %v947
        %vm1083 = vcmp.lt.f32.partialorder %v1082, 0.0004427343
        %v1084 = vsel %vm1083, %v1081, %v1078
        %v1085 = vadd.f32 %v949, 1.0
        %v1086 = vlog2.pop %v1085
        %v1087 = vmul.f32 %v1086, 0.6931472
        %v1088 = vmul.f32 -0.5, %v949
        %v1089 = vadd.f32 %v1088, 1.0
        %v1090 = vmul.f32 %v1089, %v949
        %v1091 = vand.u32 2147483647, %v949
        %vm1092 = vcmp.lt.f32.partialorder %v1091, 0.0004427343
        %v1093 = vsel %vm1092, %v1090, %v1087
        %v1094 = vadd.f32 %v838, %v958
        %v1095 = vadd.f32 %v839, %v967
        %v1096 = vadd.f32 %v840, %v976
        %v1097 = vadd.f32 %v841, %v985
        %v1098 = vadd.f32 %v842, %v994
        %v1099 = vadd.f32 %v843, %v1003
        %v1100 = vadd.f32 %v844, %v1012
        %v1101 = vadd.f32 %v845, %v1021
        %v1102 = vadd.f32 %v846, %v1030
        %v1103 = vadd.f32 %v847, %v1039
        %v1104 = vadd.f32 %v848, %v1048
        %v1105 = vadd.f32 %v849, %v1057
        %v1106 = vadd.f32 %v850, %v1066
        %v1107 = vadd.f32 %v851, %v1075
        %v1108 = vadd.f32 %v852, %v1084
        %v1109 = vadd.f32 %v853, %v1093
        %v1110 = vsel %vm854, %v870, %v1094
        %v1111 = vsel %vm855, %v871, %v1095
        %v1112 = vsel %vm856, %v872, %v1096
        %v1113 = vsel %vm857, %v873, %v1097
        %v1114 = vsel %vm858, %v874, %v1098
        %v1115 = vsel %vm859, %v875, %v1099
        %v1116 = vsel %vm860, %v876, %v1100
        %v1117 = vsel %vm861, %v877, %v1101
        %v1118 = vsel %vm862, %v878, %v1102
        %v1119 = vsel %vm863, %v879, %v1103
        %v1120 = vsel %vm864, %v880, %v1104
        %v1121 = vsel %vm865, %v881, %v1105
        %v1122 = vsel %vm866, %v882, %v1106
        %v1123 = vsel %vm867, %v883, %v1107
        %v1124 = vsel %vm868, %v884, %v1108
        %v1125 = vsel %vm869, %v885, %v1109
        %v1126 = vsub.f32 %v1110, 0.6931472
        %v1127 = vsub.f32 %v1111, 0.6931472
        %v1128 = vsub.f32 %v1112, 0.6931472
        %v1129 = vsub.f32 %v1113, 0.6931472
        %v1130 = vsub.f32 %v1114, 0.6931472
        %v1131 = vsub.f32 %v1115, 0.6931472
        %v1132 = vsub.f32 %v1116, 0.6931472
        %v1133 = vsub.f32 %v1117, 0.6931472
        %v1134 = vsub.f32 %v1118, 0.6931472
        %v1135 = vsub.f32 %v1119, 0.6931472
        %v1136 = vsub.f32 %v1120, 0.6931472
        %v1137 = vsub.f32 %v1121, 0.6931472
        %v1138 = vsub.f32 %v1122, 0.6931472
        %v1139 = vsub.f32 %v1123, 0.6931472
        %v1140 = vsub.f32 %v1124, 0.6931472
        %v1141 = vsub.f32 %v1125, 0.6931472
        %v1142 = vld [vmem:[%s8] sm:$0xff]
        %v1143 = vld [vmem:[%s8 + $0x8] sm:$0xff]
        %v1144 = vld [vmem:[%s8 + $0x10] sm:$0xff]
        %v1145 = vld [vmem:[%s8 + $0x18] sm:$0xff]
        %v1146 = vld [vmem:[%s8 + $0x20] sm:$0xff]
        %v1147 = vld [vmem:[%s8 + $0x28] sm:$0xff]
        %v1148 = vld [vmem:[%s8 + $0x30] sm:$0xff]
        %v1149 = vld [vmem:[%s8 + $0x38] sm:$0xff]
        %v1150 = vld [vmem:[%s8 + $0x40] sm:$0xff]
        %v1151 = vld [vmem:[%s8 + $0x48] sm:$0xff]
        %v1152 = vld [vmem:[%s8 + $0x50] sm:$0xff]
        %v1153 = vld [vmem:[%s8 + $0x58] sm:$0xff]
        %v1154 = vld [vmem:[%s8 + $0x60] sm:$0xff]
        %v1155 = vld [vmem:[%s8 + $0x68] sm:$0xff]
        %v1156 = vld [vmem:[%s8 + $0x70] sm:$0xff]
        %v1157 = vld [vmem:[%s8 + $0x78] sm:$0xff]
        %v1158 = vld [vmem:[%s9] sm:$0x1]
        %v1160 = vlaneseq
        %v1161 = vshrl.u32 %v1160, 7
        %v1162 = vsub.s32 0, %v1161
        %v1163 = vrot.slane %v1158, %v1162
        %1165 = vmatprep.subr.mxu0 0.0
        %1166 = vmatpush1.msra.mxu0 %v1157
        %1167 = vmatprep.subr.mxu0 0.0
        %1168 = vmatpush1.msra.mxu0 %v1156
        %1169 = vmatprep.subr.mxu0 0.0
        %1170 = vmatpush1.msra.mxu0 %v1155
        %1171 = vmatprep.subr.mxu0 0.0
        %1172 = vmatpush1.msra.mxu0 %v1154
        %1173 = vmatprep.subr.mxu0 0.0
        %1174 = vmatpush1.msra.mxu0 %v1153
        %1175 = vmatprep.subr.mxu0 0.0
        %1176 = vmatpush1.msra.mxu0 %v1152
        %1177 = vmatprep.subr.mxu0 0.0
        %1178 = vmatpush1.msra.mxu0 %v1151
        %1179 = vmatprep.subr.mxu0 0.0
        %1180 = vmatpush1.msra.mxu0 %v1150
        %1181 = vmatprep.subr.mxu0 0.0
        %1182 = vmatpush1.msra.mxu0 %v1149
        %1183 = vmatprep.subr.mxu0 0.0
        %1184 = vmatpush1.msra.mxu0 %v1148
        %1185 = vmatprep.subr.mxu0 0.0
        %1186 = vmatpush1.msra.mxu0 %v1147
        %1187 = vmatprep.subr.mxu0 0.0
        %1188 = vmatpush1.msra.mxu0 %v1146
        %1189 = vmatprep.subr.mxu0 0.0
        %1190 = vmatpush1.msra.mxu0 %v1145
        %1191 = vmatprep.subr.mxu0 0.0
        %1192 = vmatpush1.msra.mxu0 %v1144
        %1193 = vmatprep.subr.mxu0 0.0
        %1194 = vmatpush1.msra.mxu0 %v1143
        %1195 = vmatprep.subr.mxu0 0.0
        %1196 = vmatpush1.msra.mxu0 %v1142
        %1197 = vmatprep.subr.mxu0 0.0
        %1198 = vmatpush2.msra.mxu0 0.0
        %1199 = vmatprep.subr.mxu0 0.0
        %1200 = vmatpush2.msra.mxu0 0.0
        %1201 = vmatprep.subr.mxu0 0.0
        %1202 = vmatpush2.msra.mxu0 0.0
        %1203 = vmatprep.subr.mxu0 0.0
        %1204 = vmatpush2.msra.mxu0 0.0
        %1205 = vmatprep.subr.mxu0 0.0
        %1206 = vmatpush2.msra.mxu0 0.0
        %1207 = vmatprep.subr.mxu0 0.0
        %1208 = vmatpush2.msra.mxu0 0.0
        %1209 = vmatprep.subr.mxu0 0.0
        %1210 = vmatpush2.msra.mxu0 0.0
        %1211 = vmatprep.subr.mxu0 0.0
        %1212 = vmatpush2.msra.mxu0 0.0
        %1213 = vmatprep.subr.mxu0 0.0
        %1214 = vmatpush2.msra.mxu0 0.0
        %1215 = vmatprep.subr.mxu0 0.0
        %1216 = vmatpush2.msra.mxu0 0.0
        %1217 = vmatprep.subr.mxu0 0.0
        %1218 = vmatpush2.msra.mxu0 0.0
        %1219 = vmatprep.subr.mxu0 0.0
        %1220 = vmatpush2.msra.mxu0 0.0
        %1221 = vmatprep.subr.mxu0 0.0
        %1222 = vmatpush2.msra.mxu0 0.0
        %1223 = vmatprep.subr.mxu0 0.0
        %1224 = vmatpush2.msra.mxu0 0.0
        %1225 = vmatprep.subr.mxu0 0.0
        %1226 = vmatpush2.msra.mxu0 0.0
        %1227 = vmatprep.subr.mxu0 0.0
        %1228 = vmatpush2.msra.mxu0 0.0
        %1229 = vmatprep.mubr.f32.mxu0 0.0
        %1230 = vmatmul.mubr.f32.gmra.mxu0 %v1126
        %v1231 = vpop.f32.mrf.mxu0
        %v1232 = vadd.f32 %v1163, %v1231
        %v1233 = vpop.f32.mrf.mxu0
        %1234 = vmatprep.mubr.f32.mxu0 0.0
        %1235 = vmatmul.mubr.f32.gmra.mxu0 %v1127
        %v1236 = vpop.f32.mrf.mxu0
        %v1237 = vadd.f32 %v1163, %v1236
        %v1238 = vpop.f32.mrf.mxu0
        %1239 = vmatprep.mubr.f32.mxu0 0.0
        %1240 = vmatmul.mubr.f32.gmra.mxu0 %v1128
        %v1241 = vpop.f32.mrf.mxu0
        %v1242 = vadd.f32 %v1163, %v1241
        %v1243 = vpop.f32.mrf.mxu0
        %1244 = vmatprep.mubr.f32.mxu0 0.0
        %1245 = vmatmul.mubr.f32.gmra.mxu0 %v1129
        %v1246 = vpop.f32.mrf.mxu0
        %v1247 = vadd.f32 %v1163, %v1246
        %v1248 = vpop.f32.mrf.mxu0
        %1249 = vmatprep.mubr.f32.mxu0 0.0
        %1250 = vmatmul.mubr.f32.gmra.mxu0 %v1130
        %v1251 = vpop.f32.mrf.mxu0
        %v1252 = vadd.f32 %v1163, %v1251
        %v1253 = vpop.f32.mrf.mxu0
        %1254 = vmatprep.mubr.f32.mxu0 0.0
        %1255 = vmatmul.mubr.f32.gmra.mxu0 %v1131
        %v1256 = vpop.f32.mrf.mxu0
        %v1257 = vadd.f32 %v1163, %v1256
        %v1258 = vpop.f32.mrf.mxu0
        %1259 = vmatprep.mubr.f32.mxu0 0.0
        %1260 = vmatmul.mubr.f32.gmra.mxu0 %v1132
        %v1261 = vpop.f32.mrf.mxu0
        %v1262 = vadd.f32 %v1163, %v1261
        %v1263 = vpop.f32.mrf.mxu0
        %1264 = vmatprep.mubr.f32.mxu0 0.0
        %1265 = vmatmul.mubr.f32.gmra.mxu0 %v1133
        %v1266 = vpop.f32.mrf.mxu0
        %v1267 = vadd.f32 %v1163, %v1266
        %v1268 = vpop.f32.mrf.mxu0
        %1269 = vmatprep.mubr.f32.mxu0 0.0
        %1270 = vmatmul.mubr.f32.gmra.mxu0 %v1134
        %v1271 = vpop.f32.mrf.mxu0
        %v1272 = vadd.f32 %v1163, %v1271
        %v1273 = vpop.f32.mrf.mxu0
        %1274 = vmatprep.mubr.f32.mxu0 0.0
        %1275 = vmatmul.mubr.f32.gmra.mxu0 %v1135
        %v1276 = vpop.f32.mrf.mxu0
        %v1277 = vadd.f32 %v1163, %v1276
        %v1278 = vpop.f32.mrf.mxu0
        %1279 = vmatprep.mubr.f32.mxu0 0.0
        %1280 = vmatmul.mubr.f32.gmra.mxu0 %v1136
        %v1281 = vpop.f32.mrf.mxu0
        %v1282 = vadd.f32 %v1163, %v1281
        %v1283 = vpop.f32.mrf.mxu0
        %1284 = vmatprep.mubr.f32.mxu0 0.0
        %1285 = vmatmul.mubr.f32.gmra.mxu0 %v1137
        %v1286 = vpop.f32.mrf.mxu0
        %v1287 = vadd.f32 %v1163, %v1286
        %v1288 = vpop.f32.mrf.mxu0
        %1289 = vmatprep.mubr.f32.mxu0 0.0
        %1290 = vmatmul.mubr.f32.gmra.mxu0 %v1138
        %v1291 = vpop.f32.mrf.mxu0
        %v1292 = vadd.f32 %v1163, %v1291
        %v1293 = vpop.f32.mrf.mxu0
        %1294 = vmatprep.mubr.f32.mxu0 0.0
        %1295 = vmatmul.mubr.f32.gmra.mxu0 %v1139
        %v1296 = vpop.f32.mrf.mxu0
        %v1297 = vadd.f32 %v1163, %v1296
        %v1298 = vpop.f32.mrf.mxu0
        %1299 = vmatprep.mubr.f32.mxu0 0.0
        %1300 = vmatmul.mubr.f32.gmra.mxu0 %v1140
        %v1301 = vpop.f32.mrf.mxu0
        %v1302 = vadd.f32 %v1163, %v1301
        %v1303 = vpop.f32.mrf.mxu0
        %1304 = vmatprep.mubr.f32.mxu0 0.0
        %1305 = vmatmul.mubr.f32.gmra.mxu0 %v1141
        %v1306 = vpop.f32.mrf.mxu0
        %v1307 = vadd.f32 %v1163, %v1306
        %v1308 = vpop.f32.mrf.mxu0
        %1309 = vdwg.mxu0
        %v1310 = vld [vmem:[%s550] sm:$0xff]
        %v1311 = vld [vmem:[%s550 + $0x8] sm:$0xff]
        %v1312 = vld [vmem:[%s550 + $0x10] sm:$0xff]
        %v1313 = vld [vmem:[%s550 + $0x18] sm:$0xff]
        %v1314 = vld [vmem:[%s550 + $0x20] sm:$0xff]
        %v1315 = vld [vmem:[%s550 + $0x28] sm:$0xff]
        %v1316 = vld [vmem:[%s550 + $0x30] sm:$0xff]
        %v1317 = vld [vmem:[%s550 + $0x38] sm:$0xff]
        %v1318 = vld [vmem:[%s550 + $0x40] sm:$0xff]
        %v1319 = vld [vmem:[%s550 + $0x48] sm:$0xff]
        %v1320 = vld [vmem:[%s550 + $0x50] sm:$0xff]
        %v1321 = vld [vmem:[%s550 + $0x58] sm:$0xff]
        %v1322 = vld [vmem:[%s550 + $0x60] sm:$0xff]
        %v1323 = vld [vmem:[%s550 + $0x68] sm:$0xff]
        %v1324 = vld [vmem:[%s550 + $0x70] sm:$0xff]
        %v1325 = vld [vmem:[%s550 + $0x78] sm:$0xff]
        %1327 = vset.pattern.permute.xlu0 0
        %1328 = vperm.xlu0 %1327, %v1310
        %v1329 = vpop.permute.xlu0 %1328
        %1332 = vset.pattern.permute.xlu0 0
        %1333 = vperm.xlu0 %1332, %v1311
        %v1334 = vpop.permute.xlu0 %1333
        %1337 = vset.pattern.permute.xlu0 0
        %1338 = vperm.xlu0 %1337, %v1312
        %v1339 = vpop.permute.xlu0 %1338
        %1342 = vset.pattern.permute.xlu0 0
        %1343 = vperm.xlu0 %1342, %v1313
        %v1344 = vpop.permute.xlu0 %1343
        %1347 = vset.pattern.permute.xlu0 0
        %1348 = vperm.xlu0 %1347, %v1314
        %v1349 = vpop.permute.xlu0 %1348
        %1352 = vset.pattern.permute.xlu0 0
        %1353 = vperm.xlu0 %1352, %v1315
        %v1354 = vpop.permute.xlu0 %1353
        %1357 = vset.pattern.permute.xlu0 0
        %1358 = vperm.xlu0 %1357, %v1316
        %v1359 = vpop.permute.xlu0 %1358
        %1362 = vset.pattern.permute.xlu0 0
        %1363 = vperm.xlu0 %1362, %v1317
        %v1364 = vpop.permute.xlu0 %1363
        %1367 = vset.pattern.permute.xlu0 0
        %1368 = vperm.xlu0 %1367, %v1318
        %v1369 = vpop.permute.xlu0 %1368
        %1372 = vset.pattern.permute.xlu0 0
        %1373 = vperm.xlu0 %1372, %v1319
        %v1374 = vpop.permute.xlu0 %1373
        %1377 = vset.pattern.permute.xlu0 0
        %1378 = vperm.xlu0 %1377, %v1320
        %v1379 = vpop.permute.xlu0 %1378
        %1382 = vset.pattern.permute.xlu0 0
        %1383 = vperm.xlu0 %1382, %v1321
        %v1384 = vpop.permute.xlu0 %1383
        %1387 = vset.pattern.permute.xlu0 0
        %1388 = vperm.xlu0 %1387, %v1322
        %v1389 = vpop.permute.xlu0 %1388
        %1392 = vset.pattern.permute.xlu0 0
        %1393 = vperm.xlu0 %1392, %v1323
        %v1394 = vpop.permute.xlu0 %1393
        %1397 = vset.pattern.permute.xlu0 0
        %1398 = vperm.xlu0 %1397, %v1324
        %v1399 = vpop.permute.xlu0 %1398
        %1402 = vset.pattern.permute.xlu0 0
        %1403 = vperm.xlu0 %1402, %v1325
        %v1404 = vpop.permute.xlu0 %1403
        %v1406 = vmul.f32 %v1232, %v1329
        %v1407 = vmul.f32 %v1237, %v1334
        %v1408 = vmul.f32 %v1242, %v1339
        %v1409 = vmul.f32 %v1247, %v1344
        %v1410 = vmul.f32 %v1252, %v1349
        %v1411 = vmul.f32 %v1257, %v1354
        %v1412 = vmul.f32 %v1262, %v1359
        %v1413 = vmul.f32 %v1267, %v1364
        %v1414 = vmul.f32 %v1272, %v1369
        %v1415 = vmul.f32 %v1277, %v1374
        %v1416 = vmul.f32 %v1282, %v1379
        %v1417 = vmul.f32 %v1287, %v1384
        %v1418 = vmul.f32 %v1292, %v1389
        %v1419 = vmul.f32 %v1297, %v1394
        %v1420 = vmul.f32 %v1302, %v1399
        %v1421 = vmul.f32 %v1307, %v1404
        %v1422 = vlaneseq
        %v1423 = vand.u32 %v1422, 127
        %v1424 = vld [vmem:[%s544] sm:$0xff]
        %v1425 = vld [vmem:[%s544 + $0x8] sm:$0xff]
        %v1426 = vld [vmem:[%s544 + $0x10] sm:$0xff]
        %v1427 = vld [vmem:[%s544 + $0x18] sm:$0xff]
        %v1428 = vld [vmem:[%s544 + $0x20] sm:$0xff]
        %v1429 = vld [vmem:[%s544 + $0x28] sm:$0xff]
        %v1430 = vld [vmem:[%s544 + $0x30] sm:$0xff]
        %v1431 = vld [vmem:[%s544 + $0x38] sm:$0xff]
        %v1432 = vld [vmem:[%s544 + $0x40] sm:$0xff]
        %v1433 = vld [vmem:[%s544 + $0x48] sm:$0xff]
        %v1434 = vld [vmem:[%s544 + $0x50] sm:$0xff]
        %v1435 = vld [vmem:[%s544 + $0x58] sm:$0xff]
        %v1436 = vld [vmem:[%s544 + $0x60] sm:$0xff]
        %v1437 = vld [vmem:[%s544 + $0x68] sm:$0xff]
        %v1438 = vld [vmem:[%s544 + $0x70] sm:$0xff]
        %v1439 = vld [vmem:[%s544 + $0x78] sm:$0xff]
        %1440 = vset.pattern.permute.xlu0 0
        %1441 = vperm.xlu0 %1440, %v1424
        %v1442 = vpop.permute.xlu0 %1441
        %1443 = vset.pattern.permute.xlu0 0
        %1444 = vperm.xlu0 %1443, %v1425
        %v1445 = vpop.permute.xlu0 %1444
        %1446 = vset.pattern.permute.xlu0 0
        %1447 = vperm.xlu0 %1446, %v1426
        %v1448 = vpop.permute.xlu0 %1447
        %1449 = vset.pattern.permute.xlu0 0
        %1450 = vperm.xlu0 %1449, %v1427
        %v1451 = vpop.permute.xlu0 %1450
        %1452 = vset.pattern.permute.xlu0 0
        %1453 = vperm.xlu0 %1452, %v1428
        %v1454 = vpop.permute.xlu0 %1453
        %1455 = vset.pattern.permute.xlu0 0
        %1456 = vperm.xlu0 %1455, %v1429
        %v1457 = vpop.permute.xlu0 %1456
        %1458 = vset.pattern.permute.xlu0 0
        %1459 = vperm.xlu0 %1458, %v1430
        %v1460 = vpop.permute.xlu0 %1459
        %1461 = vset.pattern.permute.xlu0 0
        %1462 = vperm.xlu0 %1461, %v1431
        %v1463 = vpop.permute.xlu0 %1462
        %1464 = vset.pattern.permute.xlu0 0
        %1465 = vperm.xlu0 %1464, %v1432
        %v1466 = vpop.permute.xlu0 %1465
        %1467 = vset.pattern.permute.xlu0 0
        %1468 = vperm.xlu0 %1467, %v1433
        %v1469 = vpop.permute.xlu0 %1468
        %1470 = vset.pattern.permute.xlu0 0
        %1471 = vperm.xlu0 %1470, %v1434
        %v1472 = vpop.permute.xlu0 %1471
        %1473 = vset.pattern.permute.xlu0 0
        %1474 = vperm.xlu0 %1473, %v1435
        %v1475 = vpop.permute.xlu0 %1474
        %1476 = vset.pattern.permute.xlu0 0
        %1477 = vperm.xlu0 %1476, %v1436
        %v1478 = vpop.permute.xlu0 %1477
        %1479 = vset.pattern.permute.xlu0 0
        %1480 = vperm.xlu0 %1479, %v1437
        %v1481 = vpop.permute.xlu0 %1480
        %1482 = vset.pattern.permute.xlu0 0
        %1483 = vperm.xlu0 %1482, %v1438
        %v1484 = vpop.permute.xlu0 %1483
        %1485 = vset.pattern.permute.xlu0 0
        %1486 = vperm.xlu0 %1485, %v1439
        %v1487 = vpop.permute.xlu0 %1486
        %vm1488 = vcmp.eq.s32.totalorder %v1442, %v1423
        %vm1489 = vcmp.eq.s32.totalorder %v1445, %v1423
        %vm1490 = vcmp.eq.s32.totalorder %v1448, %v1423
        %vm1491 = vcmp.eq.s32.totalorder %v1451, %v1423
        %vm1492 = vcmp.eq.s32.totalorder %v1454, %v1423
        %vm1493 = vcmp.eq.s32.totalorder %v1457, %v1423
        %vm1494 = vcmp.eq.s32.totalorder %v1460, %v1423
        %vm1495 = vcmp.eq.s32.totalorder %v1463, %v1423
        %vm1496 = vcmp.eq.s32.totalorder %v1466, %v1423
        %vm1497 = vcmp.eq.s32.totalorder %v1469, %v1423
        %vm1498 = vcmp.eq.s32.totalorder %v1472, %v1423
        %vm1499 = vcmp.eq.s32.totalorder %v1475, %v1423
        %vm1500 = vcmp.eq.s32.totalorder %v1478, %v1423
        %vm1501 = vcmp.eq.s32.totalorder %v1481, %v1423
        %vm1502 = vcmp.eq.s32.totalorder %v1484, %v1423
        %vm1503 = vcmp.eq.s32.totalorder %v1487, %v1423
        %v1504 = vsel %vm1488, 1, 0
        %v1505 = vsel %vm1489, 1, 0
        %v1506 = vsel %vm1490, 1, 0
        %v1507 = vsel %vm1491, 1, 0
        %v1508 = vsel %vm1492, 1, 0
        %v1509 = vsel %vm1493, 1, 0
        %v1510 = vsel %vm1494, 1, 0
        %v1511 = vsel %vm1495, 1, 0
        %v1512 = vsel %vm1496, 1, 0
        %v1513 = vsel %vm1497, 1, 0
        %v1514 = vsel %vm1498, 1, 0
        %v1515 = vsel %vm1499, 1, 0
        %v1516 = vsel %vm1500, 1, 0
        %v1517 = vsel %vm1501, 1, 0
        %v1518 = vsel %vm1502, 1, 0
        %v1519 = vsel %vm1503, 1, 0
        %v1520 = vcvt.s32.f32 %v1504
        %v1521 = vcvt.s32.f32 %v1505
        %v1522 = vcvt.s32.f32 %v1506
        %v1523 = vcvt.s32.f32 %v1507
        %v1524 = vcvt.s32.f32 %v1508
        %v1525 = vcvt.s32.f32 %v1509
        %v1526 = vcvt.s32.f32 %v1510
        %v1527 = vcvt.s32.f32 %v1511
        %v1528 = vcvt.s32.f32 %v1512
        %v1529 = vcvt.s32.f32 %v1513
        %v1530 = vcvt.s32.f32 %v1514
        %v1531 = vcvt.s32.f32 %v1515
        %v1532 = vcvt.s32.f32 %v1516
        %v1533 = vcvt.s32.f32 %v1517
        %v1534 = vcvt.s32.f32 %v1518
        %v1535 = vcvt.s32.f32 %v1519
        %v1536 = vpack.c.bf16 %v1521, %v1520
        %v1537 = vpack.c.bf16 %v1523, %v1522
        %v1538 = vpack.c.bf16 %v1525, %v1524
        %v1539 = vpack.c.bf16 %v1527, %v1526
        %v1540 = vpack.c.bf16 %v1529, %v1528
        %v1541 = vpack.c.bf16 %v1531, %v1530
        %v1542 = vpack.c.bf16 %v1533, %v1532
        %v1543 = vpack.c.bf16 %v1535, %v1534
        %v1544 = vld [vmem:[%s538] sm:$0xff]
        %v1545 = vld [vmem:[%s538 + $0x8] sm:$0xff]
        %v1546 = vld [vmem:[%s538 + $0x10] sm:$0xff]
        %v1547 = vld [vmem:[%s538 + $0x18] sm:$0xff]
        %v1548 = vld [vmem:[%s538 + $0x20] sm:$0xff]
        %v1549 = vld [vmem:[%s538 + $0x28] sm:$0xff]
        %v1550 = vld [vmem:[%s538 + $0x30] sm:$0xff]
        %v1551 = vld [vmem:[%s538 + $0x38] sm:$0xff]
        %v1552 = vld [vmem:[%s538 + $0x40] sm:$0xff]
        %v1553 = vld [vmem:[%s538 + $0x48] sm:$0xff]
        %v1554 = vld [vmem:[%s538 + $0x50] sm:$0xff]
        %v1555 = vld [vmem:[%s538 + $0x58] sm:$0xff]
        %v1556 = vld [vmem:[%s538 + $0x60] sm:$0xff]
        %v1557 = vld [vmem:[%s538 + $0x68] sm:$0xff]
        %v1558 = vld [vmem:[%s538 + $0x70] sm:$0xff]
        %v1559 = vld [vmem:[%s538 + $0x78] sm:$0xff]
        %1560 = vset.pattern.permute.xlu0 0
        %1561 = vperm.xlu0 %1560, %v1544
        %v1562 = vpop.permute.xlu0 %1561
        %1563 = vset.pattern.permute.xlu0 0
        %1564 = vperm.xlu0 %1563, %v1545
        %v1565 = vpop.permute.xlu0 %1564
        %1566 = vset.pattern.permute.xlu0 0
        %1567 = vperm.xlu0 %1566, %v1546
        %v1568 = vpop.permute.xlu0 %1567
        %1569 = vset.pattern.permute.xlu0 0
        %1570 = vperm.xlu0 %1569, %v1547
        %v1571 = vpop.permute.xlu0 %1570
        %1572 = vset.pattern.permute.xlu0 0
        %1573 = vperm.xlu0 %1572, %v1548
        %v1574 = vpop.permute.xlu0 %1573
        %1575 = vset.pattern.permute.xlu0 0
        %1576 = vperm.xlu0 %1575, %v1549
        %v1577 = vpop.permute.xlu0 %1576
        %1578 = vset.pattern.permute.xlu0 0
        %1579 = vperm.xlu0 %1578, %v1550
        %v1580 = vpop.permute.xlu0 %1579
        %1581 = vset.pattern.permute.xlu0 0
        %1582 = vperm.xlu0 %1581, %v1551
        %v1583 = vpop.permute.xlu0 %1582
        %1584 = vset.pattern.permute.xlu0 0
        %1585 = vperm.xlu0 %1584, %v1552
        %v1586 = vpop.permute.xlu0 %1585
        %1587 = vset.pattern.permute.xlu0 0
        %1588 = vperm.xlu0 %1587, %v1553
        %v1589 = vpop.permute.xlu0 %1588
        %1590 = vset.pattern.permute.xlu0 0
        %1591 = vperm.xlu0 %1590, %v1554
        %v1592 = vpop.permute.xlu0 %1591
        %1593 = vset.pattern.permute.xlu0 0
        %1594 = vperm.xlu0 %1593, %v1555
        %v1595 = vpop.permute.xlu0 %1594
        %1596 = vset.pattern.permute.xlu0 0
        %1597 = vperm.xlu0 %1596, %v1556
        %v1598 = vpop.permute.xlu0 %1597
        %1599 = vset.pattern.permute.xlu0 0
        %1600 = vperm.xlu0 %1599, %v1557
        %v1601 = vpop.permute.xlu0 %1600
        %1602 = vset.pattern.permute.xlu0 0
        %1603 = vperm.xlu0 %1602, %v1558
        %v1604 = vpop.permute.xlu0 %1603
        %1605 = vset.pattern.permute.xlu0 0
        %1606 = vperm.xlu0 %1605, %v1559
        %v1607 = vpop.permute.xlu0 %1606
        %vm1608 = vcmp.eq.s32.totalorder %v1562, %v1423
        %vm1609 = vcmp.eq.s32.totalorder %v1565, %v1423
        %vm1610 = vcmp.eq.s32.totalorder %v1568, %v1423
        %vm1611 = vcmp.eq.s32.totalorder %v1571, %v1423
        %vm1612 = vcmp.eq.s32.totalorder %v1574, %v1423
        %vm1613 = vcmp.eq.s32.totalorder %v1577, %v1423
        %vm1614 = vcmp.eq.s32.totalorder %v1580, %v1423
        %vm1615 = vcmp.eq.s32.totalorder %v1583, %v1423
        %vm1616 = vcmp.eq.s32.totalorder %v1586, %v1423
        %vm1617 = vcmp.eq.s32.totalorder %v1589, %v1423
        %vm1618 = vcmp.eq.s32.totalorder %v1592, %v1423
        %vm1619 = vcmp.eq.s32.totalorder %v1595, %v1423
        %vm1620 = vcmp.eq.s32.totalorder %v1598, %v1423
        %vm1621 = vcmp.eq.s32.totalorder %v1601, %v1423
        %vm1622 = vcmp.eq.s32.totalorder %v1604, %v1423
        %vm1623 = vcmp.eq.s32.totalorder %v1607, %v1423
        %v1624 = vsel %vm1608, 1, 0
        %v1625 = vsel %vm1609, 1, 0
        %v1626 = vsel %vm1610, 1, 0
        %v1627 = vsel %vm1611, 1, 0
        %v1628 = vsel %vm1612, 1, 0
        %v1629 = vsel %vm1613, 1, 0
        %v1630 = vsel %vm1614, 1, 0
        %v1631 = vsel %vm1615, 1, 0
        %v1632 = vsel %vm1616, 1, 0
        %v1633 = vsel %vm1617, 1, 0
        %v1634 = vsel %vm1618, 1, 0
        %v1635 = vsel %vm1619, 1, 0
        %v1636 = vsel %vm1620, 1, 0
        %v1637 = vsel %vm1621, 1, 0
        %v1638 = vsel %vm1622, 1, 0
        %v1639 = vsel %vm1623, 1, 0
        %v1640 = vcvt.s32.f32 %v1624
        %v1641 = vcvt.s32.f32 %v1625
        %v1642 = vcvt.s32.f32 %v1626
        %v1643 = vcvt.s32.f32 %v1627
        %v1644 = vcvt.s32.f32 %v1628
        %v1645 = vcvt.s32.f32 %v1629
        %v1646 = vcvt.s32.f32 %v1630
        %v1647 = vcvt.s32.f32 %v1631
        %v1648 = vcvt.s32.f32 %v1632
        %v1649 = vcvt.s32.f32 %v1633
        %v1650 = vcvt.s32.f32 %v1634
        %v1651 = vcvt.s32.f32 %v1635
        %v1652 = vcvt.s32.f32 %v1636
        %v1653 = vcvt.s32.f32 %v1637
        %v1654 = vcvt.s32.f32 %v1638
        %v1655 = vcvt.s32.f32 %v1639
        %v1656 = vpack.c.bf16 %v1641, %v1640
        %v1657 = vpack.c.bf16 %v1643, %v1642
        %v1658 = vpack.c.bf16 %v1645, %v1644
        %v1659 = vpack.c.bf16 %v1647, %v1646
        %v1660 = vpack.c.bf16 %v1649, %v1648
        %v1661 = vpack.c.bf16 %v1651, %v1650
        %v1662 = vpack.c.bf16 %v1653, %v1652
        %v1663 = vpack.c.bf16 %v1655, %v1654
        %v1664 = vld [vmem:[#allocation2] sm:$0xff]
        %v1665 = vld [vmem:[#allocation2 + $0x8] sm:$0xff]
        %v1666 = vpack.c.bf16 %v1665, %v1664
        %vm1667 = vcmask 130048
        %v1669 = vsel %vm1667, %v1536, 0
        %v1672 = vsel %vm1667, %v1537, 0
        %v1675 = vsel %vm1667, %v1538, 0
        %v1678 = vsel %vm1667, %v1539, 0
        %v1681 = vsel %vm1667, %v1540, 0
        %v1684 = vsel %vm1667, %v1541, 0
        %v1687 = vsel %vm1667, %v1542, 0
        %v1690 = vsel %vm1667, %v1543, 0
        %1692 = vmatprep.subr.bf16.mxu0 0
        %1693 = vmatpush1.bf16.msra.mxu0 0
        %1694 = vmatprep.subr.bf16.mxu0 0
        %1695 = vmatpush1.bf16.msra.mxu0 0
        %1696 = vmatprep.subr.bf16.mxu0 0
        %1697 = vmatpush1.bf16.msra.mxu0 0
        %1698 = vmatprep.subr.bf16.mxu0 0
        %1699 = vmatpush1.bf16.msra.mxu0 0
        %1700 = vmatprep.subr.bf16.mxu0 0
        %1701 = vmatpush1.bf16.msra.mxu0 0
        %1702 = vmatprep.subr.bf16.mxu0 0
        %1703 = vmatpush1.bf16.msra.mxu0 0
        %1704 = vmatprep.subr.bf16.mxu0 0
        %1705 = vmatpush1.bf16.msra.mxu0 0
        %1706 = vmatprep.subr.bf16.mxu0 0
        %1707 = vmatpush1.bf16.msra.mxu0 %v1666
        %1708 = vmatprep.subr.bf16.mxu0 0
        %1709 = vmatpush2.bf16.msra.mxu0 0
        %1710 = vmatprep.subr.bf16.mxu0 0
        %1711 = vmatpush2.bf16.msra.mxu0 0
        %1712 = vmatprep.subr.bf16.mxu0 0
        %1713 = vmatpush2.bf16.msra.mxu0 0
        %1714 = vmatprep.subr.bf16.mxu0 0
        %1715 = vmatpush2.bf16.msra.mxu0 0
        %1716 = vmatprep.subr.bf16.mxu0 0
        %1717 = vmatpush2.bf16.msra.mxu0 0
        %1718 = vmatprep.subr.bf16.mxu0 0
        %1719 = vmatpush2.bf16.msra.mxu0 0
        %1720 = vmatprep.subr.bf16.mxu0 0
        %1721 = vmatpush2.bf16.msra.mxu0 0
        %1722 = vmatprep.subr.bf16.mxu0 0
        %1723 = vmatpush2.bf16.msra.mxu0 0
        %1724 = vmatprep.mubr.bf16.mxu0 0
        %1725 = vmatmul.mubr.bf16.gmra.mxu0 %v1669
        %v1726 = vpop.f32.mrf.mxu0
        %v1727 = vadd.f32 0.0, %v1726
        %v1728 = vpop.f32.mrf.mxu0
        %v1729 = vpop.f32.mrf.mxu0
        %v1730 = vadd.f32 0.0, %v1729
        %v1731 = vpop.f32.mrf.mxu0
        %1732 = vmatprep.mubr.bf16.mxu0 0
        %1733 = vmatmul.mubr.bf16.gmra.mxu0 %v1672
        %v1734 = vpop.f32.mrf.mxu0
        %v1735 = vadd.f32 0.0, %v1734
        %v1736 = vpop.f32.mrf.mxu0
        %v1737 = vpop.f32.mrf.mxu0
        %v1738 = vadd.f32 0.0, %v1737
        %v1739 = vpop.f32.mrf.mxu0
        %1740 = vmatprep.mubr.bf16.mxu0 0
        %1741 = vmatmul.mubr.bf16.gmra.mxu0 %v1675
        %v1742 = vpop.f32.mrf.mxu0
        %v1743 = vadd.f32 0.0, %v1742
        %v1744 = vpop.f32.mrf.mxu0
        %v1745 = vpop.f32.mrf.mxu0
        %v1746 = vadd.f32 0.0, %v1745
        %v1747 = vpop.f32.mrf.mxu0
        %1748 = vmatprep.mubr.bf16.mxu0 0
        %1749 = vmatmul.mubr.bf16.gmra.mxu0 %v1678
        %v1750 = vpop.f32.mrf.mxu0
        %v1751 = vadd.f32 0.0, %v1750
        %v1752 = vpop.f32.mrf.mxu0
        %v1753 = vpop.f32.mrf.mxu0
        %v1754 = vadd.f32 0.0, %v1753
        %v1755 = vpop.f32.mrf.mxu0
        %1756 = vmatprep.mubr.bf16.mxu0 0
        %1757 = vmatmul.mubr.bf16.gmra.mxu0 %v1681
        %v1758 = vpop.f32.mrf.mxu0
        %v1759 = vadd.f32 0.0, %v1758
        %v1760 = vpop.f32.mrf.mxu0
        %v1761 = vpop.f32.mrf.mxu0
        %v1762 = vadd.f32 0.0, %v1761
        %v1763 = vpop.f32.mrf.mxu0
        %1764 = vmatprep.mubr.bf16.mxu0 0
        %1765 = vmatmul.mubr.bf16.gmra.mxu0 %v1684
        %v1766 = vpop.f32.mrf.mxu0
        %v1767 = vadd.f32 0.0, %v1766
        %v1768 = vpop.f32.mrf.mxu0
        %v1769 = vpop.f32.mrf.mxu0
        %v1770 = vadd.f32 0.0, %v1769
        %v1771 = vpop.f32.mrf.mxu0
        %1772 = vmatprep.mubr.bf16.mxu0 0
        %1773 = vmatmul.mubr.bf16.gmra.mxu0 %v1687
        %v1774 = vpop.f32.mrf.mxu0
        %v1775 = vadd.f32 0.0, %v1774
        %v1776 = vpop.f32.mrf.mxu0
        %v1777 = vpop.f32.mrf.mxu0
        %v1778 = vadd.f32 0.0, %v1777
        %v1779 = vpop.f32.mrf.mxu0
        %1780 = vmatprep.mubr.bf16.mxu0 0
        %1781 = vmatmul.mubr.bf16.gmra.mxu0 %v1690
        %v1782 = vpop.f32.mrf.mxu0
        %v1783 = vadd.f32 0.0, %v1782
        %v1784 = vpop.f32.mrf.mxu0
        %v1785 = vpop.f32.mrf.mxu0
        %v1786 = vadd.f32 0.0, %v1785
        %v1787 = vpop.f32.mrf.mxu0
        %1788 = vdwg.mxu0
        %v1789 = vmul.f32 %v1727, %v1406
        %v1790 = vmul.f32 %v1730, %v1407
        %v1791 = vmul.f32 %v1735, %v1408
        %v1792 = vmul.f32 %v1738, %v1409
        %v1793 = vmul.f32 %v1743, %v1410
        %v1794 = vmul.f32 %v1746, %v1411
        %v1795 = vmul.f32 %v1751, %v1412
        %v1796 = vmul.f32 %v1754, %v1413
        %v1797 = vmul.f32 %v1759, %v1414
        %v1798 = vmul.f32 %v1762, %v1415
        %v1799 = vmul.f32 %v1767, %v1416
        %v1800 = vmul.f32 %v1770, %v1417
        %v1801 = vmul.f32 %v1775, %v1418
        %v1802 = vmul.f32 %v1778, %v1419
        %v1803 = vmul.f32 %v1783, %v1420
        %v1804 = vmul.f32 %v1786, %v1421
        %v1805 = vld [vmem:[#allocation3] sm:$0xff]
        %v1806 = vld [vmem:[#allocation3 + $0x8] sm:$0xff]
        %v1807 = vpack.c.bf16 %v1790, %v1789
        %v1808 = vpack.c.bf16 %v1792, %v1791
        %v1809 = vpack.c.bf16 %v1794, %v1793
        %v1810 = vpack.c.bf16 %v1796, %v1795
        %v1811 = vpack.c.bf16 %v1798, %v1797
        %v1812 = vpack.c.bf16 %v1800, %v1799
        %v1813 = vpack.c.bf16 %v1802, %v1801
        %v1814 = vpack.c.bf16 %v1804, %v1803
        %1815 = vxpose.xlu0.c.b16.start [1/8] %v1656, 128
        %1816 = vxpose.xlu0.c.b16.cont [2/8] %v1657, 128
        %1817 = vxpose.xlu0.c.b16.cont [3/8] %v1658, 128
        %1818 = vxpose.xlu0.c.b16.cont [4/8] %v1659, 128
        %1819 = vxpose.xlu0.c.b16.cont [5/8] %v1660, 128
        %1820 = vxpose.xlu0.c.b16.cont [6/8] %v1661, 128
        %1821 = vxpose.xlu0.c.b16.cont [7/8] %v1662, 128
        %1822 = vxpose.xlu0.c.b16.end [8/8] %v1663, 128
        %v1823 = vpop.trf.xlu0
        %v1824 = vpop.trf.xlu0
        %v1825 = vpop.trf.xlu0
        %v1826 = vpop.trf.xlu0
        %v1827 = vpop.trf.xlu0
        %v1828 = vpop.trf.xlu0
        %v1829 = vpop.trf.xlu0
        %v1830 = vpop.trf.xlu0
        %1831 = vmatprep.subr.bf16.mxu0 0
        %1832 = vmatpush1.bf16.msra.mxu0 %v1814
        %1833 = vmatprep.subr.bf16.mxu0 0
        %1834 = vmatpush1.bf16.msra.mxu0 %v1813
        %1835 = vmatprep.subr.bf16.mxu0 0
        %1836 = vmatpush1.bf16.msra.mxu0 %v1812
        %1837 = vmatprep.subr.bf16.mxu0 0
        %1838 = vmatpush1.bf16.msra.mxu0 %v1811
        %1839 = vmatprep.subr.bf16.mxu0 0
        %1840 = vmatpush1.bf16.msra.mxu0 %v1810
        %1841 = vmatprep.subr.bf16.mxu0 0
        %1842 = vmatpush1.bf16.msra.mxu0 %v1809
        %1843 = vmatprep.subr.bf16.mxu0 0
        %1844 = vmatpush1.bf16.msra.mxu0 %v1808
        %1845 = vmatprep.subr.bf16.mxu0 0
        %1846 = vmatpush1.bf16.msra.mxu0 %v1807
        %1847 = vmatprep.subr.bf16.mxu0 0
        %1848 = vmatpush2.bf16.msra.mxu0 0
        %1849 = vmatprep.subr.bf16.mxu0 0
        %1850 = vmatpush2.bf16.msra.mxu0 0
        %1851 = vmatprep.subr.bf16.mxu0 0
        %1852 = vmatpush2.bf16.msra.mxu0 0
        %1853 = vmatprep.subr.bf16.mxu0 0
        %1854 = vmatpush2.bf16.msra.mxu0 0
        %1855 = vmatprep.subr.bf16.mxu0 0
        %1856 = vmatpush2.bf16.msra.mxu0 0
        %1857 = vmatprep.subr.bf16.mxu0 0
        %1858 = vmatpush2.bf16.msra.mxu0 0
        %1859 = vmatprep.subr.bf16.mxu0 0
        %1860 = vmatpush2.bf16.msra.mxu0 0
        %1861 = vmatprep.subr.bf16.mxu0 0
        %1862 = vmatpush2.bf16.msra.mxu0 0
        %1863 = vmatprep.mubr.bf16.mxu0 0
        %1864 = vmatmul.mubr.bf16.gmra.mxu0 %v1823
        %v1865 = vpop.f32.mrf.mxu0
        %v1866 = vadd.f32 0.0, %v1865
        %v1867 = vpop.f32.mrf.mxu0
        %v1868 = vpop.f32.mrf.mxu0
        %v1869 = vadd.f32 0.0, %v1868
        %v1870 = vpop.f32.mrf.mxu0
        %1871 = vdwg.mxu0
        %v1872 = vadd.f32 %v1805, %v1866
        %v1873 = vadd.f32 %v1806, %v1869
        %1874 = vst [vmem:[#allocation3] sm:$0xff] %v1872
        %1875 = vst [vmem:[#allocation3 + $0x8] sm:$0xff] %v1873
        %p1876 = scmp.eq.s32.totalorder %s28, 1
        // Predicated region
        $region89: #{tpu_custom_call.1} parent=75 // pred_check
          %p1877 = pneg %p1876
        $region90: #{tpu_custom_call.1} parent=75 // pred_check_branch
          %1879 = sbr.rel (%p1877) target = $region92
        $region91: #{tpu_custom_call.1} parent=75 // pred_region
          %v1880 = vld [vmem:[#allocation3] sm:$0xff]
          %v1881 = vld [vmem:[#allocation3 + $0x8] sm:$0xff]
          %v1882 = vld [vmem:[%s10] sm:$0xff]
          %v1883 = vld [vmem:[%s10 + $0x8] sm:$0xff]
          %v1884 = vld [vmem:[%s10 + $0x10] sm:$0xff]
          %v1885 = vld [vmem:[%s10 + $0x18] sm:$0xff]
          %v1886 = vld [vmem:[%s10 + $0x20] sm:$0xff]
          %v1887 = vld [vmem:[%s10 + $0x28] sm:$0xff]
          %v1888 = vld [vmem:[%s10 + $0x30] sm:$0xff]
          %v1889 = vld [vmem:[%s10 + $0x38] sm:$0xff]
          %v1890 = vld [vmem:[%s10 + $0x40] sm:$0xff]
          %v1891 = vld [vmem:[%s10 + $0x48] sm:$0xff]
          %v1892 = vld [vmem:[%s10 + $0x50] sm:$0xff]
          %v1893 = vld [vmem:[%s10 + $0x58] sm:$0xff]
          %v1894 = vld [vmem:[%s10 + $0x60] sm:$0xff]
          %v1895 = vld [vmem:[%s10 + $0x68] sm:$0xff]
          %v1896 = vld [vmem:[%s10 + $0x70] sm:$0xff]
          %v1897 = vld [vmem:[%s10 + $0x78] sm:$0xff]
          %v1898 = vld [vmem:[%s11] sm:$0x1]
          %v1900 = vlaneseq
          %v1901 = vshrl.u32 %v1900, 7
          %v1902 = vsub.s32 0, %v1901
          %v1903 = vrot.slane %v1898, %v1902
          %1905 = vmatprep.subr.mxu0 0.0
          %1906 = vmatpush1.msra.mxu0 %v1897
          %1907 = vmatprep.subr.mxu0 0.0
          %1908 = vmatpush1.msra.mxu0 %v1896
          %1909 = vmatprep.subr.mxu0 0.0
          %1910 = vmatpush1.msra.mxu0 %v1895
          %1911 = vmatprep.subr.mxu0 0.0
          %1912 = vmatpush1.msra.mxu0 %v1894
          %1913 = vmatprep.subr.mxu0 0.0
          %1914 = vmatpush1.msra.mxu0 %v1893
          %1915 = vmatprep.subr.mxu0 0.0
          %1916 = vmatpush1.msra.mxu0 %v1892
          %1917 = vmatprep.subr.mxu0 0.0
          %1918 = vmatpush1.msra.mxu0 %v1891
          %1919 = vmatprep.subr.mxu0 0.0
          %1920 = vmatpush1.msra.mxu0 %v1890
          %1921 = vmatprep.subr.mxu0 0.0
          %1922 = vmatpush1.msra.mxu0 %v1889
          %1923 = vmatprep.subr.mxu0 0.0
          %1924 = vmatpush1.msra.mxu0 %v1888
          %1925 = vmatprep.subr.mxu0 0.0
          %1926 = vmatpush1.msra.mxu0 %v1887
          %1927 = vmatprep.subr.mxu0 0.0
          %1928 = vmatpush1.msra.mxu0 %v1886
          %1929 = vmatprep.subr.mxu0 0.0
          %1930 = vmatpush1.msra.mxu0 %v1885
          %1931 = vmatprep.subr.mxu0 0.0
          %1932 = vmatpush1.msra.mxu0 %v1884
          %1933 = vmatprep.subr.mxu0 0.0
          %1934 = vmatpush1.msra.mxu0 %v1883
          %1935 = vmatprep.subr.mxu0 0.0
          %1936 = vmatpush1.msra.mxu0 %v1882
          %1937 = vmatprep.subr.mxu0 0.0
          %1938 = vmatpush2.msra.mxu0 0.0
          %1939 = vmatprep.subr.mxu0 0.0
          %1940 = vmatpush2.msra.mxu0 0.0
          %1941 = vmatprep.subr.mxu0 0.0
          %1942 = vmatpush2.msra.mxu0 0.0
          %1943 = vmatprep.subr.mxu0 0.0
          %1944 = vmatpush2.msra.mxu0 0.0
          %1945 = vmatprep.subr.mxu0 0.0
          %1946 = vmatpush2.msra.mxu0 0.0
          %1947 = vmatprep.subr.mxu0 0.0
          %1948 = vmatpush2.msra.mxu0 0.0
          %1949 = vmatprep.subr.mxu0 0.0
          %1950 = vmatpush2.msra.mxu0 0.0
          %1951 = vmatprep.subr.mxu0 0.0
          %1952 = vmatpush2.msra.mxu0 0.0
          %1953 = vmatprep.subr.mxu0 0.0
          %1954 = vmatpush2.msra.mxu0 0.0
          %1955 = vmatprep.subr.mxu0 0.0
          %1956 = vmatpush2.msra.mxu0 0.0
          %1957 = vmatprep.subr.mxu0 0.0
          %1958 = vmatpush2.msra.mxu0 0.0
          %1959 = vmatprep.subr.mxu0 0.0
          %1960 = vmatpush2.msra.mxu0 0.0
          %1961 = vmatprep.subr.mxu0 0.0
          %1962 = vmatpush2.msra.mxu0 0.0
          %1963 = vmatprep.subr.mxu0 0.0
          %1964 = vmatpush2.msra.mxu0 0.0
          %1965 = vmatprep.subr.mxu0 0.0
          %1966 = vmatpush2.msra.mxu0 0.0
          %1967 = vmatprep.subr.mxu0 0.0
          %1968 = vmatpush2.msra.mxu0 0.0
          %1969 = vmatprep.mubr.f32.mxu0 0.0
          %1970 = vmatmul.mubr.f32.gmra.mxu0 %v1880
          %v1971 = vpop.f32.mrf.mxu0
          %v1972 = vadd.f32 %v1903, %v1971
          %v1973 = vpop.f32.mrf.mxu0
          %1974 = vmatprep.mubr.f32.mxu0 0.0
          %1975 = vmatmul.mubr.f32.gmra.mxu0 %v1881
          %v1976 = vpop.f32.mrf.mxu0
          %v1977 = vadd.f32 %v1903, %v1976
          %v1978 = vpop.f32.mrf.mxu0
          %1979 = vdwg.mxu0
          %v1980 = vmax.f32 %v1972, 0.0
          %v1981 = vmax.f32 %v1977, 0.0
          %vm1982 = vcmp.ne.f32.partialorder %v1972, %v1972
          %vm1983 = vcmp.ne.f32.partialorder %v1977, %v1977
          %v1984 = vadd.f32 %v1972, 0.0
          %v1985 = vadd.f32 %v1977, 0.0
          %v1986 = vand.u32 2147483647, %v1972
          %v1987 = vand.u32 2147483647, %v1977
          %v1988 = vsub.f32 0.0, %v1986
          %v1989 = vsub.f32 0.0, %v1987
          %v1990 = vmul.f32 %v1988, 1.442695
          %v1991 = vpow.pop %v1990
          %v1992 = vmul.f32 %v1989, 1.442695
          %v1993 = vpow.pop %v1992
          %v1994 = vadd.f32 %v1991, 1.0
          %v1995 = vlog2.pop %v1994
          %v1996 = vmul.f32 %v1995, 0.6931472
          %v1997 = vmul.f32 -0.5, %v1991
          %v1998 = vadd.f32 %v1997, 1.0
          %v1999 = vmul.f32 %v1998, %v1991
          %v2000 = vand.u32 2147483647, %v1991
          %vm2001 = vcmp.lt.f32.partialorder %v2000, 0.0004427343
          %v2002 = vsel %vm2001, %v1999, %v1996
          %v2003 = vadd.f32 %v1993, 1.0
          %v2004 = vlog2.pop %v2003
          %v2005 = vmul.f32 %v2004, 0.6931472
          %v2006 = vmul.f32 -0.5, %v1993
          %v2007 = vadd.f32 %v2006, 1.0
          %v2008 = vmul.f32 %v2007, %v1993
          %v2009 = vand.u32 2147483647, %v1993
          %vm2010 = vcmp.lt.f32.partialorder %v2009, 0.0004427343
          %v2011 = vsel %vm2010, %v2008, %v2005
          %v2012 = vadd.f32 %v1980, %v2002
          %v2013 = vadd.f32 %v1981, %v2011
          %v2014 = vsel %vm1982, %v1984, %v2012
          %v2015 = vsel %vm1983, %v1985, %v2013
          %v2016 = vsub.f32 %v2014, 0.6931472
          %v2017 = vsub.f32 %v2015, 0.6931472
          %v2018 = vld [vmem:[#allocation7] sm:$0xff]
          %v2019 = vld [vmem:[#allocation7 + $0x8] sm:$0xff]
          %v2020 = vld [vmem:[#allocation7 + $0x10] sm:$0xff]
          %v2021 = vld [vmem:[#allocation7 + $0x18] sm:$0xff]
          %v2022 = vld [vmem:[#allocation7 + $0x20] sm:$0xff]
          %v2023 = vld [vmem:[#allocation7 + $0x28] sm:$0xff]
          %v2024 = vld [vmem:[#allocation7 + $0x30] sm:$0xff]
          %v2025 = vld [vmem:[#allocation7 + $0x38] sm:$0xff]
          %v2026 = vld [vmem:[#allocation7 + $0x40] sm:$0xff]
          %v2027 = vld [vmem:[#allocation7 + $0x48] sm:$0xff]
          %v2028 = vld [vmem:[#allocation7 + $0x50] sm:$0xff]
          %v2029 = vld [vmem:[#allocation7 + $0x58] sm:$0xff]
          %v2030 = vld [vmem:[#allocation7 + $0x60] sm:$0xff]
          %v2031 = vld [vmem:[#allocation7 + $0x68] sm:$0xff]
          %v2032 = vld [vmem:[#allocation7 + $0x70] sm:$0xff]
          %v2033 = vld [vmem:[#allocation7 + $0x78] sm:$0xff]
          %v2034 = vld [vmem:[%s13] sm:$0x1]
          %v2036 = vlaneseq
          %v2037 = vshrl.u32 %v2036, 7
          %v2038 = vsub.s32 0, %v2037
          %v2039 = vrot.slane %v2034, %v2038
          %2041 = vmatprep.subr.mxu0 0.0
          %2042 = vmatpush1.msra.mxu0 %v2033
          %2043 = vmatprep.subr.mxu0 0.0
          %2044 = vmatpush1.msra.mxu0 %v2032
          %2045 = vmatprep.subr.mxu0 0.0
          %2046 = vmatpush1.msra.mxu0 %v2031
          %2047 = vmatprep.subr.mxu0 0.0
          %2048 = vmatpush1.msra.mxu0 %v2030
          %2049 = vmatprep.subr.mxu0 0.0
          %2050 = vmatpush1.msra.mxu0 %v2029
          %2051 = vmatprep.subr.mxu0 0.0
          %2052 = vmatpush1.msra.mxu0 %v2028
          %2053 = vmatprep.subr.mxu0 0.0
          %2054 = vmatpush1.msra.mxu0 %v2027
          %2055 = vmatprep.subr.mxu0 0.0
          %2056 = vmatpush1.msra.mxu0 %v2026
          %2057 = vmatprep.subr.mxu0 0.0
          %2058 = vmatpush1.msra.mxu0 %v2025
          %2059 = vmatprep.subr.mxu0 0.0
          %2060 = vmatpush1.msra.mxu0 %v2024
          %2061 = vmatprep.subr.mxu0 0.0
          %2062 = vmatpush1.msra.mxu0 %v2023
          %2063 = vmatprep.subr.mxu0 0.0
          %2064 = vmatpush1.msra.mxu0 %v2022
          %2065 = vmatprep.subr.mxu0 0.0
          %2066 = vmatpush1.msra.mxu0 %v2021
          %2067 = vmatprep.subr.mxu0 0.0
          %2068 = vmatpush1.msra.mxu0 %v2020
          %2069 = vmatprep.subr.mxu0 0.0
          %2070 = vmatpush1.msra.mxu0 %v2019
          %2071 = vmatprep.subr.mxu0 0.0
          %2072 = vmatpush1.msra.mxu0 %v2018
          %2073 = vmatprep.subr.mxu0 0.0
          %2074 = vmatpush2.msra.mxu0 0.0
          %2075 = vmatprep.subr.mxu0 0.0
          %2076 = vmatpush2.msra.mxu0 0.0
          %2077 = vmatprep.subr.mxu0 0.0
          %2078 = vmatpush2.msra.mxu0 0.0
          %2079 = vmatprep.subr.mxu0 0.0
          %2080 = vmatpush2.msra.mxu0 0.0
          %2081 = vmatprep.subr.mxu0 0.0
          %2082 = vmatpush2.msra.mxu0 0.0
          %2083 = vmatprep.subr.mxu0 0.0
          %2084 = vmatpush2.msra.mxu0 0.0
          %2085 = vmatprep.subr.mxu0 0.0
          %2086 = vmatpush2.msra.mxu0 0.0
          %2087 = vmatprep.subr.mxu0 0.0
          %2088 = vmatpush2.msra.mxu0 0.0
          %2089 = vmatprep.subr.mxu0 0.0
          %2090 = vmatpush2.msra.mxu0 0.0
          %2091 = vmatprep.subr.mxu0 0.0
          %2092 = vmatpush2.msra.mxu0 0.0
          %2093 = vmatprep.subr.mxu0 0.0
          %2094 = vmatpush2.msra.mxu0 0.0
          %2095 = vmatprep.subr.mxu0 0.0
          %2096 = vmatpush2.msra.mxu0 0.0
          %2097 = vmatprep.subr.mxu0 0.0
          %2098 = vmatpush2.msra.mxu0 0.0
          %2099 = vmatprep.subr.mxu0 0.0
          %2100 = vmatpush2.msra.mxu0 0.0
          %2101 = vmatprep.subr.mxu0 0.0
          %2102 = vmatpush2.msra.mxu0 0.0
          %2103 = vmatprep.subr.mxu0 0.0
          %2104 = vmatpush2.msra.mxu0 0.0
          %2105 = vmatprep.mubr.f32.mxu0 0.0
          %2106 = vmatmul.mubr.f32.gmra.mxu0 %v2016
          %v2107 = vpop.f32.mrf.mxu0
          %v2108 = vadd.f32 %v2039, %v2107
          %v2109 = vpop.f32.mrf.mxu0
          %2110 = vmatprep.mubr.f32.mxu0 0.0
          %2111 = vmatmul.mubr.f32.gmra.mxu0 %v2017
          %v2112 = vpop.f32.mrf.mxu0
          %v2113 = vadd.f32 %v2039, %v2112
          %v2114 = vpop.f32.mrf.mxu0
          %2115 = vdwg.mxu0
          %2116 = vst [vmem:[#allocation9] sm:$0xff] %v2108
          %2117 = vst [vmem:[#allocation9 + $0x8] sm:$0xff] %v2113
        $region92: #{tpu_custom_call.1} parent=75 // pred_fallthru
          _
        // Predicated region
        $region93: #{tpu_custom_call.1} parent=75 // pred_check
          %p2118 = pneg %p355
        $region94: #{tpu_custom_call.1} parent=75 // pred_check_branch
          %2120 = sbr.rel (%p2118) target = $region96
        $region95: #{tpu_custom_call.1} parent=75 // pred_region
          %s2122 = ssub.s32 256, 256
          %2123 = vsyncadd [#allocation6], %s2122
          %s2124 = sshll.u32 [#allocation9], 4
          %s2125 = int_to_ptr.vmem [resolvable:$true] %s2124
          %2130 = dma.vmem_to_hbm [thread:$0]  %s2125, 256, %s14, [#allocation6], 128, 128, 8
        $region96: #{tpu_custom_call.1} parent=75 // pred_fallthru
          _
        // Predicated region
        $region97: #{tpu_custom_call.1} parent=75 // pred_check
          %p2131 = pneg %p355
        $region98: #{tpu_custom_call.1} parent=75 // pred_check_branch
          %2133 = sbr.rel (%p2131) target = $region100
        $region99: #{tpu_custom_call.1} parent=75 // pred_region
          %2134 = dma.done [#allocation6], 256
        $region100: #{tpu_custom_call.1} parent=75 // pred_fallthru
          _
      $region76: #{tpu_custom_call.1} parent=5 // pred_fallthru
        _
      %p2135 = scmp.le.s32.totalorder 2, %s23
      // Predicated region
      $region101: #{tpu_custom_call.1} parent=5 // pred_check
        %p2136 = pneg %p2135
      $region102: #{tpu_custom_call.1} parent=5 // pred_check_branch
        %2138 = sbr.rel (%p2136) target = $region104
      $region103: #{tpu_custom_call.1} parent=5 // pred_region
        %s2139 = ssub.s32 %s23, 2
      $region104: #{tpu_custom_call.1} parent=5 // pred_fallthru
        _
    $region6: #{tpu_custom_call.1} parent=1 // loop_footer
      %s27 = sadd.s32 1, %s23
    $region7: #{tpu_custom_call.1} parent=1 // loop_footer_branch
      %22 = sbr.rel target = $region3
    $region8: #{tpu_custom_call.1} parent=1 // loop_exit
      _
    %2140 = vsyncpa [#allocation5], 1
    %s2141 = scalar_lea.sflag [#allocation5], 1
    %2142 = vsyncpa %s2141, 1
    %2143 = vsyncpa [#allocation8], 1
    %2144 = vsyncpa [#allocation6], 1
    %s2145 = scalar_lea.sflag [#allocation6], 1
    %2146 = vsyncpa %s2145, 1

</llo_original>
